<compile_context>
chip_gen: v7x
topology: tpu7x:2x2x1
jax: 0.10.0
libtpu: 0.0.40
codegen_flags: <defaults>
</compile_context>

<pallas_src>
import functools

import jax
import jax.numpy as jnp
from jax.experimental import pallas as pl
from jax.experimental.pallas import tpu as pltpu


def _round_up(x, m):
    return (x + m - 1) // m * m


def _vmem_limit_bytes():
    # v5e/v6e: 128 MiB physical -> 96 MiB; v7x: 64 MiB -> 48 MiB.
    try:
        cap = int(pltpu.get_tpu_info().vmem_capacity_bytes)
    except Exception:
        cap = 64 * 1024 * 1024
    return int(min(96 * 1024 * 1024, max(32 * 1024 * 1024, (cap * 3) // 4)))


def _mish(x):
    # mish(x) = x*tanh(softplus(x)) = x * n(n+2)/(n(n+2)+2), n = exp(x).
    # 1 EUP exp + 1 EUP approx reciprocal; guard x > 20 (tanh(softplus)->1).
    n = jnp.exp(jnp.minimum(x, 20.0))
    q = n * (n + 2.0)
    t = q * pl.reciprocal(q + 2.0, approx=True)
    return x * jnp.where(x > 20.0, 1.0, t)


# --------------------------------------------------------------------------- #
# Fused ResidualBlock2D forward                                                #
# --------------------------------------------------------------------------- #
def residual_block2d_forward(params, x, kernel_size=3, n_groups=8):
    """x: (B, Cin, H, W) f32 -> (B, Cout, H, W) f32 (matches torch module)."""
    B, Cin, H, W = x.shape
    K = kernel_size
    assert K % 2 == 1
    p = K // 2
    Wp, Hp = W + 2 * p, H + 2 * p
    HWp = H * Wp                         # flat conv-output grid (padded width)
    HWp_c = _round_up(HWp, 128)          # lane-dense compute / output width
    roff = p * Wp + p                    # flat offset of content (0,0) in padded grid
    off_max = 2 * roff                   # largest tap offset
    KK = K * K
    L = _round_up(off_max + HWp_c, 128)  # flattened padded-input length (>= Hp*Wp)

    Cout = params["b0"]["w"].shape[0]
    G = n_groups
    assert Cout % G == 0, "GroupNorm requires out_channels % n_groups == 0"
    Cg = Cout // G
    Cin_al = _round_up(Cin, 8)           # 8-sublane aligned im2col row blocks
    Cout_al = _round_up(Cout, 8)
    has_res_conv = params["res"] is not None
    if not has_res_conv:
        assert Cin == Cout

    # hpad geometry: store h at a 128-aligned lane offset; taps read at rb+off.
    s_h = _round_up(roff, 128)
    rb = s_h - roff
    L1 = _round_up(rb + off_max + HWp_c, 128)

    # ---- host-side layout prep (single small pass) -------------------------
    xp = jnp.pad(x, ((0, 0), (0, 0), (p, p), (p, p)))            # (B,Cin,Hp,Wp)
    x0f = xp.reshape(B, Cin, Hp * Wp)
    x0f = jnp.pad(x0f, ((0, 0), (0, 0), (0, L - Hp * Wp))).astype(jnp.bfloat16)

    def fold_w(w, c_al):                 # (Cout,Cin,K,K) -> (Cout, KK*c_al) bf16
        co, ci, kh, kw = w.shape
        w4 = jnp.transpose(w, (0, 2, 3, 1))
        w4 = jnp.pad(w4, ((0, 0), (0, 0), (0, 0), (0, c_al - ci)))
        return w4.reshape(co, kh * kw * c_al).astype(jnp.bfloat16)

    def colv(v):
        return v.reshape(-1, 1).astype(jnp.float32)

    w0 = fold_w(params["b0"]["w"], Cin_al)
    w1 = fold_w(params["b1"]["w"], Cout_al)

    ch = jnp.arange(Cout) // Cg          # group-mean selection (tiny matmul)
    same_group = (ch[:, None] == ch[None, :]).astype(jnp.float32) / float(Cg * H * W)
    idx = jnp.arange(HWp_c)
    valid = ((idx < HWp) & ((idx % Wp) < W)).astype(jnp.float32)[None, :]

    tap_offsets = [(t // K) * Wp + (t % K) for t in range(KK)]
    eps = 1e-5

    def gn_mish(acc, gamma, beta, sg, v):
        row_sum = jnp.sum(acc * v, axis=1, keepdims=True)                 # (Cout,1)
        mean = jnp.dot(sg, row_sum, preferred_element_type=jnp.float32)   # group mean
        cen = acc - mean
        row_sq = jnp.sum(cen * cen * v, axis=1, keepdims=True)
        var = jnp.dot(sg, row_sq, preferred_element_type=jnp.float32)     # biased var
        y = cen * jax.lax.rsqrt(var + eps) * gamma + beta
        return _mish(y)

    def kernel(x_ref, w0_ref, b0_ref, g0_ref, bt0_ref,
               w1_ref, b1_ref, g1_ref, bt1_ref, sg_ref, v_ref, *rest):
        if has_res_conv:
            wr_ref, br_ref, o_ref, col0, hpad, col1 = rest
        else:
            o_ref, col0, hpad, col1 = rest
        v = v_ref[...]

        # ---- Conv2dBlock 0: im2col staged in VMEM -> one folded MXU matmul --
        if Cin_al != Cin:
            col0[...] = jnp.zeros_like(col0)
        for t, off in enumerate(tap_offsets):
            col0[t * Cin_al:t * Cin_al + Cin, :] = x_ref[0, :, off:off + HWp_c]
        acc0 = jnp.dot(w0_ref[...], col0[...],
                       preferred_element_type=jnp.float32) + b0_ref[...]
        h = gn_mish(acc0, g0_ref[...], bt0_ref[...], sg_ref[...], v) * v   # zero pad cols

        # ---- re-pad h in VMEM for block 1 (never touches HBM) ---------------
        hpad[...] = jnp.zeros_like(hpad)                     # zero border rows/cols
        hpad[:, s_h:s_h + HWp] = h[:, :HWp].astype(jnp.bfloat16)

        # ---- Conv2dBlock 1 ---------------------------------------------------
        if Cout_al != Cout:
            col1[...] = jnp.zeros_like(col1)
        for t, off in enumerate(tap_offsets):
            col1[t * Cout_al:t * Cout_al + Cout, :] = hpad[:, rb + off:rb + off + HWp_c]
        acc1 = jnp.dot(w1_ref[...], col1[...],
                       preferred_element_type=jnp.float32) + b1_ref[...]
        y = gn_mish(acc1, g1_ref[...], bt1_ref[...], sg_ref[...], v)

        # ---- residual: reuse the already-resident padded input --------------
        xr = x_ref[0, :, roff:roff + HWp_c]                  # (Cin, HWp_c) bf16
        if has_res_conv:
            r = jnp.dot(wr_ref[...], xr,
                        preferred_element_type=jnp.float32) + br_ref[...]
        else:
            r = xr.astype(jnp.float32)
        o_ref[0] = y + r

    vec = pl.BlockSpec((Cout, 1), lambda b: (0, 0))
    in_specs = [
        pl.BlockSpec((1, Cin, L), lambda b: (b, 0, 0)),
        pl.BlockSpec((Cout, KK * Cin_al), lambda b: (0, 0)), vec, vec, vec,
        pl.BlockSpec((Cout, KK * Cout_al), lambda b: (0, 0)), vec, vec, vec,
        pl.BlockSpec((Cout, Cout), lambda b: (0, 0)),
        pl.BlockSpec((1, HWp_c), lambda b: (0, 0)),
    ]
    args = [x0f, w0, colv(params["b0"]["b"]), colv(params["b0"]["gamma"]),
            colv(params["b0"]["beta"]), w1, colv(params["b1"]["b"]),
            colv(params["b1"]["gamma"]), colv(params["b1"]["beta"]),
            same_group, valid]
    if has_res_conv:
        in_specs += [pl.BlockSpec((Cout, Cin), lambda b: (0, 0)), vec]
        args += [params["res"]["w"].reshape(Cout, Cin).astype(jnp.bfloat16),
                 colv(params["res"]["b"])]

    scratch_shapes = [
        pltpu.VMEM((KK * Cin_al, HWp_c), jnp.bfloat16),   # im2col block 0
        pltpu.VMEM((Cout, L1), jnp.bfloat16),             # padded h for block 1
        pltpu.VMEM((KK * Cout_al, HWp_c), jnp.bfloat16),  # im2col block 1
    ]

    flops = B * (2 * Cout * KK * Cin_al * HWp_c + 2 * Cout * KK * Cout_al * HWp_c
                 + (2 * Cout * Cin * HWp_c if has_res_conv else 0)
                 + 8 * Cout * Cout + 24 * Cout * HWp_c)
    transcendentals = 4 * B * Cout * HWp_c
    bytes_accessed = (x0f.size * 2 + w0.size * 2 + w1.size * 2
                      + Cout * Cout * 4 + HWp_c * 4 + 10 * Cout * 4
                      + B * Cout * HWp_c * 4)

    out = pl.pallas_call(
        kernel,
        out_shape=jax.ShapeDtypeStruct((B, Cout, HWp_c), jnp.float32),
        grid=(B,),
        in_specs=in_specs,
        out_specs=pl.BlockSpec((1, Cout, HWp_c), lambda b: (b, 0, 0)),
        scratch_shapes=scratch_shapes,
        compiler_params=pltpu.CompilerParams(
            dimension_semantics=("parallel",),
            vmem_limit_bytes=_vmem_limit_bytes()),
        cost_estimate=pl.CostEstimate(flops=int(flops),
                                      transcendentals=int(transcendentals),
                                      bytes_accessed=int(bytes_accessed)),
    )(*args)

    # Drop lane padding + the padded-width columns: (B,Cout,HWp_c) -> (B,Cout,H,W)
    return out[:, :, :HWp].reshape(B, Cout, H, Wp)[..., :W]


# --------------------------------------------------------------------------- #
# Deterministic params + pure-JAX f32 reference                                 #
# --------------------------------------------------------------------------- #
def init_params(key, in_channels, out_channels, kernel_size=3):
    ks = jax.random.split(key, 10)

    def rn(k, shape, scale=0.1):
        return scale * jax.random.normal(k, shape, jnp.float32)

    return {
        "b0": {"w": rn(ks[0], (out_channels, in_channels, kernel_size, kernel_size)),
               "b": rn(ks[1], (out_channels,)),
               "gamma": 1.0 + rn(ks[2], (out_channels,)),
               "beta": rn(ks[3], (out_channels,))},
        "b1": {"w": rn(ks[4], (out_channels, out_channels, kernel_size, kernel_size)),
               "b": rn(ks[5], (out_channels,)),
               "gamma": 1.0 + rn(ks[6], (out_channels,)),
               "beta": rn(ks[7], (out_channels,))},
        "res": ({"w": rn(ks[8], (out_channels, in_channels, 1, 1)),
                 "b": rn(ks[9], (out_channels,))}
                if in_channels != out_channels else None),
    }


def residual_block2d_reference(params, x, kernel_size=3, n_groups=8):
    def conv2d(x, w, b, pad):
        y = jax.lax.conv_general_dilated(
            x, w, window_strides=(1, 1), padding=[(pad, pad), (pad, pad)],
            dimension_numbers=("NCHW", "OIHW", "NCHW"))
        return y + b[None, :, None, None]

    def gn_mish(y, gamma, beta):
        B, C, H, W = y.shape
        Cg = C // n_groups
        yg = y.reshape(B, n_groups, Cg * H * W)
        m = jnp.mean(yg, -1, keepdims=True)
        v = jnp.mean((yg - m) ** 2, -1, keepdims=True)
        yn = ((yg - m) * jax.lax.rsqrt(v + 1e-5)).reshape(B, C, H, W)
        yn = yn * gamma[None, :, None, None] + beta[None, :, None, None]
        return yn * jnp.tanh(jax.nn.softplus(yn))

    p = kernel_size // 2
    h = gn_mish(conv2d(x, params["b0"]["w"], params["b0"]["b"], p),
                params["b0"]["gamma"], params["b0"]["beta"])
    h = gn_mish(conv2d(h, params["b1"]["w"], params["b1"]["b"], p),
                params["b1"]["gamma"], params["b1"]["beta"])
    res = (conv2d(x, params["res"]["w"], params["res"]["b"], 0)
           if params["res"] is not None else x)
    return h + res


# --------------------------------------------------------------------------- #
if __name__ == "__main__":
    B, CIN, COUT, H, W = 2, 4, 16, 16, 16
    K, NG = 3, 8

    key = jax.random.PRNGKey(0)
    kparam, kdata = jax.random.split(key)
    params = init_params(kparam, CIN, COUT, K)
    x = jax.random.normal(kdata, (B, CIN, H, W), jnp.float32)

    fwd = jax.jit(functools.partial(residual_block2d_forward,
                                    kernel_size=K, n_groups=NG))
    out = jax.block_until_ready(fwd(params, x))

    assert out.shape == (B, COUT, H, W), out.shape
    assert bool(jnp.all(jnp.isfinite(out)))

    # Check against a pure-JAX f32 reference (kernel feeds the MXU in bf16).
    ref = residual_block2d_reference(params, x, K, NG)
    abs_err = float(jnp.max(jnp.abs(out - ref)))
    rel_err = float(jnp.linalg.norm(out - ref) / jnp.linalg.norm(ref))
    assert abs_err < 0.15 and rel_err < 0.05, (abs_err, rel_err)

    print("KERNEL_OK")
</pallas_src>

<mosaic_0001>
module attributes {stable_mosaic.version = 11 : i64} {
  func.func @kernel(%arg0: i32, %arg1: memref<1x4x512xbf16, #tpu.memory_space<vmem>>, %arg2: memref<16x72xbf16, #tpu.memory_space<vmem>>, %arg3: memref<16x1xf32, #tpu.memory_space<vmem>>, %arg4: memref<16x1xf32, #tpu.memory_space<vmem>>, %arg5: memref<16x1xf32, #tpu.memory_space<vmem>>, %arg6: memref<16x144xbf16, #tpu.memory_space<vmem>>, %arg7: memref<16x1xf32, #tpu.memory_space<vmem>>, %arg8: memref<16x1xf32, #tpu.memory_space<vmem>>, %arg9: memref<16x1xf32, #tpu.memory_space<vmem>>, %arg10: memref<16x16xf32, #tpu.memory_space<vmem>>, %arg11: memref<1x384xf32, #tpu.memory_space<vmem>>, %arg12: memref<16x4xbf16, #tpu.memory_space<vmem>>, %arg13: memref<16x1xf32, #tpu.memory_space<vmem>>, %arg14: memref<1x16x384xf32, #tpu.memory_space<vmem>>, %arg15: memref<72x384xbf16, #tpu.memory_space<vmem>>, %arg16: memref<16x640xbf16, #tpu.memory_space<vmem>>, %arg17: memref<144x384xbf16, #tpu.memory_space<vmem>>) attributes {dimension_semantics = [#tpu.dimension_semantics<parallel>], iteration_bounds = array<i64: 2>, scalar_prefetch = 0 : i64, scratch_operands = 3 : i64, tpu.core_type = #tpu.core_type<tc>, window_params = [{transform_indices = @transform_0, window_bounds = array<i64: 1, 4, 512>}, {pipeline_mode = #tpu.pipeline_mode<synchronous>, transform_indices = @transform_1, window_bounds = array<i64: 16, 72>}, {pipeline_mode = #tpu.pipeline_mode<synchronous>, transform_indices = @transform_2, window_bounds = array<i64: 16, 1>}, {pipeline_mode = #tpu.pipeline_mode<synchronous>, transform_indices = @transform_3, window_bounds = array<i64: 16, 1>}, {pipeline_mode = #tpu.pipeline_mode<synchronous>, transform_indices = @transform_4, window_bounds = array<i64: 16, 1>}, {pipeline_mode = #tpu.pipeline_mode<synchronous>, transform_indices = @transform_5, window_bounds = array<i64: 16, 144>}, {pipeline_mode = #tpu.pipeline_mode<synchronous>, transform_indices = @transform_6, window_bounds = array<i64: 16, 1>}, {pipeline_mode = #tpu.pipeline_mode<synchronous>, transform_indices = @transform_7, window_bounds = array<i64: 16, 1>}, {pipeline_mode = #tpu.pipeline_mode<synchronous>, transform_indices = @transform_8, window_bounds = array<i64: 16, 1>}, {pipeline_mode = #tpu.pipeline_mode<synchronous>, transform_indices = @transform_9, window_bounds = array<i64: 16, 16>}, {pipeline_mode = #tpu.pipeline_mode<synchronous>, transform_indices = @transform_10, window_bounds = array<i64: 1, 384>}, {pipeline_mode = #tpu.pipeline_mode<synchronous>, transform_indices = @transform_11, window_bounds = array<i64: 16, 4>}, {pipeline_mode = #tpu.pipeline_mode<synchronous>, transform_indices = @transform_12, window_bounds = array<i64: 16, 1>}, {transform_indices = @transform_13, window_bounds = array<i64: 1, 16, 384>}]} {
    %c0 = arith.constant 0 : index
    %c0_0 = arith.constant 0 : index
    %0 = vector.load %arg11[%c0, %c0_0] : memref<1x384xf32, #tpu.memory_space<vmem>>, vector<1x384xf32>
    %cst = arith.constant 0.000000e+00 : bf16
    %1 = vector.broadcast %cst : bf16 to vector<72x384xbf16>
    %c0_1 = arith.constant 0 : index
    %c0_2 = arith.constant 0 : index
    %2 = vector.load %arg15[%c0_1, %c0_2] : memref<72x384xbf16, #tpu.memory_space<vmem>>, vector<72x384xbf16>
    tpu.vector_store %arg15[%c0_1, %c0_2], %1 {strides = array<i32>} : memref<72x384xbf16, #tpu.memory_space<vmem>>, vector<72x384xbf16>,
    %c0_3 = arith.constant 0 : index
    %c0_4 = arith.constant 0 : index
    %c0_5 = arith.constant 0 : index
    %3 = vector.load %arg1[%c0_3, %c0_4, %c0_5] : memref<1x4x512xbf16, #tpu.memory_space<vmem>>, vector<1x4x384xbf16>
    %4 = vector.shape_cast %3 : vector<1x4x384xbf16> to vector<4x384xbf16>
    %c0_6 = arith.constant 0 : index
    %c0_7 = arith.constant 0 : index
    %5 = vector.load %arg15[%c0_6, %c0_7] : memref<72x384xbf16, #tpu.memory_space<vmem>>, vector<4x384xbf16>
    tpu.vector_store %arg15[%c0_6, %c0_7], %4 {strides = array<i32>} : memref<72x384xbf16, #tpu.memory_space<vmem>>, vector<4x384xbf16>,
    %c0_8 = arith.constant 0 : index
    %c0_9 = arith.constant 0 : index
    %c1 = arith.constant 1 : index
    %6 = vector.load %arg1[%c0_8, %c0_9, %c1] : memref<1x4x512xbf16, #tpu.memory_space<vmem>>, vector<1x4x384xbf16>
    %7 = vector.shape_cast %6 : vector<1x4x384xbf16> to vector<4x384xbf16>
    %c8 = arith.constant 8 : index
    %c0_10 = arith.constant 0 : index
    %8 = vector.load %arg15[%c8, %c0_10] : memref<72x384xbf16, #tpu.memory_space<vmem>>, vector<4x384xbf16>
    tpu.vector_store %arg15[%c8, %c0_10], %7 {strides = array<i32>} : memref<72x384xbf16, #tpu.memory_space<vmem>>, vector<4x384xbf16>,
    %c0_11 = arith.constant 0 : index
    %c0_12 = arith.constant 0 : index
    %c2 = arith.constant 2 : index
    %9 = vector.load %arg1[%c0_11, %c0_12, %c2] : memref<1x4x512xbf16, #tpu.memory_space<vmem>>, vector<1x4x384xbf16>
    %10 = vector.shape_cast %9 : vector<1x4x384xbf16> to vector<4x384xbf16>
    %c16 = arith.constant 16 : index
    %c0_13 = arith.constant 0 : index
    %11 = vector.load %arg15[%c16, %c0_13] : memref<72x384xbf16, #tpu.memory_space<vmem>>, vector<4x384xbf16>
    tpu.vector_store %arg15[%c16, %c0_13], %10 {strides = array<i32>} : memref<72x384xbf16, #tpu.memory_space<vmem>>, vector<4x384xbf16>,
    %c0_14 = arith.constant 0 : index
    %c0_15 = arith.constant 0 : index
    %c18 = arith.constant 18 : index
    %12 = vector.load %arg1[%c0_14, %c0_15, %c18] : memref<1x4x512xbf16, #tpu.memory_space<vmem>>, vector<1x4x384xbf16>
    %13 = vector.shape_cast %12 : vector<1x4x384xbf16> to vector<4x384xbf16>
    %c24 = arith.constant 24 : index
    %c0_16 = arith.constant 0 : index
    %14 = vector.load %arg15[%c24, %c0_16] : memref<72x384xbf16, #tpu.memory_space<vmem>>, vector<4x384xbf16>
    tpu.vector_store %arg15[%c24, %c0_16], %13 {strides = array<i32>} : memref<72x384xbf16, #tpu.memory_space<vmem>>, vector<4x384xbf16>,
    %c0_17 = arith.constant 0 : index
    %c0_18 = arith.constant 0 : index
    %c19 = arith.constant 19 : index
    %15 = vector.load %arg1[%c0_17, %c0_18, %c19] : memref<1x4x512xbf16, #tpu.memory_space<vmem>>, vector<1x4x384xbf16>
    %16 = vector.shape_cast %15 : vector<1x4x384xbf16> to vector<4x384xbf16>
    %c32 = arith.constant 32 : index
    %c0_19 = arith.constant 0 : index
    %17 = vector.load %arg15[%c32, %c0_19] : memref<72x384xbf16, #tpu.memory_space<vmem>>, vector<4x384xbf16>
    tpu.vector_store %arg15[%c32, %c0_19], %16 {strides = array<i32>} : memref<72x384xbf16, #tpu.memory_space<vmem>>, vector<4x384xbf16>,
    %c0_20 = arith.constant 0 : index
    %c0_21 = arith.constant 0 : index
    %c20 = arith.constant 20 : index
    %18 = vector.load %arg1[%c0_20, %c0_21, %c20] : memref<1x4x512xbf16, #tpu.memory_space<vmem>>, vector<1x4x384xbf16>
    %19 = vector.shape_cast %18 : vector<1x4x384xbf16> to vector<4x384xbf16>
    %c40 = arith.constant 40 : index
    %c0_22 = arith.constant 0 : index
    %20 = vector.load %arg15[%c40, %c0_22] : memref<72x384xbf16, #tpu.memory_space<vmem>>, vector<4x384xbf16>
    tpu.vector_store %arg15[%c40, %c0_22], %19 {strides = array<i32>} : memref<72x384xbf16, #tpu.memory_space<vmem>>, vector<4x384xbf16>,
    %c0_23 = arith.constant 0 : index
    %c0_24 = arith.constant 0 : index
    %c36 = arith.constant 36 : index
    %21 = vector.load %arg1[%c0_23, %c0_24, %c36] : memref<1x4x512xbf16, #tpu.memory_space<vmem>>, vector<1x4x384xbf16>
    %22 = vector.shape_cast %21 : vector<1x4x384xbf16> to vector<4x384xbf16>
    %c48 = arith.constant 48 : index
    %c0_25 = arith.constant 0 : index
    %23 = vector.load %arg15[%c48, %c0_25] : memref<72x384xbf16, #tpu.memory_space<vmem>>, vector<4x384xbf16>
    tpu.vector_store %arg15[%c48, %c0_25], %22 {strides = array<i32>} : memref<72x384xbf16, #tpu.memory_space<vmem>>, vector<4x384xbf16>,
    %c0_26 = arith.constant 0 : index
    %c0_27 = arith.constant 0 : index
    %c37 = arith.constant 37 : index
    %24 = vector.load %arg1[%c0_26, %c0_27, %c37] : memref<1x4x512xbf16, #tpu.memory_space<vmem>>, vector<1x4x384xbf16>
    %25 = vector.shape_cast %24 : vector<1x4x384xbf16> to vector<4x384xbf16>
    %c56 = arith.constant 56 : index
    %c0_28 = arith.constant 0 : index
    %26 = vector.load %arg15[%c56, %c0_28] : memref<72x384xbf16, #tpu.memory_space<vmem>>, vector<4x384xbf16>
    tpu.vector_store %arg15[%c56, %c0_28], %25 {strides = array<i32>} : memref<72x384xbf16, #tpu.memory_space<vmem>>, vector<4x384xbf16>,
    %c0_29 = arith.constant 0 : index
    %c0_30 = arith.constant 0 : index
    %c38 = arith.constant 38 : index
    %27 = vector.load %arg1[%c0_29, %c0_30, %c38] : memref<1x4x512xbf16, #tpu.memory_space<vmem>>, vector<1x4x384xbf16>
    %28 = vector.shape_cast %27 : vector<1x4x384xbf16> to vector<4x384xbf16>
    %c64 = arith.constant 64 : index
    %c0_31 = arith.constant 0 : index
    %29 = vector.load %arg15[%c64, %c0_31] : memref<72x384xbf16, #tpu.memory_space<vmem>>, vector<4x384xbf16>
    tpu.vector_store %arg15[%c64, %c0_31], %28 {strides = array<i32>} : memref<72x384xbf16, #tpu.memory_space<vmem>>, vector<4x384xbf16>,
    %c0_32 = arith.constant 0 : index
    %c0_33 = arith.constant 0 : index
    %30 = vector.load %arg2[%c0_32, %c0_33] : memref<16x72xbf16, #tpu.memory_space<vmem>>, vector<16x72xbf16>
    %c0_34 = arith.constant 0 : index
    %c0_35 = arith.constant 0 : index
    %31 = vector.load %arg15[%c0_34, %c0_35] : memref<72x384xbf16, #tpu.memory_space<vmem>>, vector<72x384xbf16>
    %cst_36 = arith.constant dense<0.000000e+00> : vector<16x384xf32>
    %32 = tpu.matmul %30, %31, %cst_36 {dimension_numbers = #tpu.dot_dimension_numbers<[1], [0], [0], [1], [0, 0, 1, 1], [], []>} : vector<16x72xbf16>, vector<72x384xbf16>, vector<16x384xf32> -> vector<16x384xf32>
    %c0_37 = arith.constant 0 : index
    %c0_38 = arith.constant 0 : index
    %33 = vector.load %arg3[%c0_37, %c0_38] : memref<16x1xf32, #tpu.memory_space<vmem>>, vector<16x1xf32>
    %34 = vector.broadcast %33 : vector<16x1xf32> to vector<16x384xf32>
    %35 = arith.addf %32, %34 : vector<16x384xf32>
    %c0_39 = arith.constant 0 : index
    %c0_40 = arith.constant 0 : index
    %36 = vector.load %arg4[%c0_39, %c0_40] : memref<16x1xf32, #tpu.memory_space<vmem>>, vector<16x1xf32>
    %c0_41 = arith.constant 0 : index
    %c0_42 = arith.constant 0 : index
    %37 = vector.load %arg5[%c0_41, %c0_42] : memref<16x1xf32, #tpu.memory_space<vmem>>, vector<16x1xf32>
    %c0_43 = arith.constant 0 : index
    %c0_44 = arith.constant 0 : index
    %38 = vector.load %arg10[%c0_43, %c0_44] : memref<16x16xf32, #tpu.memory_space<vmem>>, vector<16x16xf32>
    %39 = vector.broadcast %0 : vector<1x384xf32> to vector<16x384xf32>
    %40 = arith.mulf %35, %39 : vector<16x384xf32>
    %cst_45 = arith.constant dense<0.000000e+00> : vector<16xf32>
    %41 = vector.multi_reduction <add>, %40, %cst_45 [1] : vector<16x384xf32> to vector<16xf32>
    %42 = vector.shape_cast %41 : vector<16xf32> to vector<16x1xf32>
    %cst_46 = arith.constant dense<0.000000e+00> : vector<16x1xf32>
    %43 = tpu.matmul %38, %42, %cst_46 {dimension_numbers = #tpu.dot_dimension_numbers<[1], [0], [0], [1], [0, 0, 1, 1], [], []>} : vector<16x16xf32>, vector<16x1xf32>, vector<16x1xf32> -> vector<16x1xf32>
    %44 = vector.broadcast %43 : vector<16x1xf32> to vector<16x384xf32>
    %45 = arith.subf %35, %44 : vector<16x384xf32>
    %46 = arith.mulf %45, %45 : vector<16x384xf32>
    %47 = vector.broadcast %0 : vector<1x384xf32> to vector<16x384xf32>
    %48 = arith.mulf %46, %47 : vector<16x384xf32>
    %cst_47 = arith.constant dense<0.000000e+00> : vector<16xf32>
    %49 = vector.multi_reduction <add>, %48, %cst_47 [1] : vector<16x384xf32> to vector<16xf32>
    %50 = vector.shape_cast %49 : vector<16xf32> to vector<16x1xf32>
    %cst_48 = arith.constant dense<0.000000e+00> : vector<16x1xf32>
    %51 = tpu.matmul %38, %50, %cst_48 {dimension_numbers = #tpu.dot_dimension_numbers<[1], [0], [0], [1], [0, 0, 1, 1], [], []>} : vector<16x16xf32>, vector<16x1xf32>, vector<16x1xf32> -> vector<16x1xf32>
    %cst_49 = arith.constant 9.99999974E-6 : f32
    %52 = vector.broadcast %cst_49 : f32 to vector<16x1xf32>
    %53 = arith.addf %51, %52 : vector<16x1xf32>
    %54 = math.rsqrt %53 : vector<16x1xf32>
    %55 = vector.broadcast %54 : vector<16x1xf32> to vector<16x384xf32>
    %56 = arith.mulf %45, %55 : vector<16x384xf32>
    %57 = vector.broadcast %36 : vector<16x1xf32> to vector<16x384xf32>
    %58 = arith.mulf %56, %57 : vector<16x384xf32>
    %59 = vector.broadcast %37 : vector<16x1xf32> to vector<16x384xf32>
    %60 = arith.addf %58, %59 : vector<16x384xf32>
    %cst_50 = arith.constant 2.000000e+01 : f32
    %61 = vector.broadcast %cst_50 : f32 to vector<16x384xf32>
    %62 = arith.minimumf %60, %61 : vector<16x384xf32>
    %63 = math.exp %62 : vector<16x384xf32>
    %cst_51 = arith.constant 2.000000e+00 : f32
    %64 = vector.broadcast %cst_51 : f32 to vector<16x384xf32>
    %65 = arith.addf %63, %64 : vector<16x384xf32>
    %66 = arith.mulf %63, %65 : vector<16x384xf32>
    %cst_52 = arith.constant 2.000000e+00 : f32
    %67 = vector.broadcast %cst_52 : f32 to vector<16x384xf32>
    %68 = arith.addf %66, %67 : vector<16x384xf32>
    %69 = tpu.reciprocal %68 {approx = true} : vector<16x384xf32> -> vector<16x384xf32>
    %70 = arith.mulf %66, %69 : vector<16x384xf32>
    %cst_53 = arith.constant 2.000000e+01 : f32
    %71 = vector.broadcast %cst_53 : f32 to vector<16x384xf32>
    %72 = arith.cmpf ogt, %60, %71 : vector<16x384xf32>
    %cst_54 = arith.constant 1.000000e+00 : f32
    %73 = vector.broadcast %cst_54 : f32 to vector<16x384xf32>
    %74 = arith.select %72, %73, %70 : vector<16x384xi1>, vector<16x384xf32>
    %75 = arith.mulf %60, %74 : vector<16x384xf32>
    %76 = vector.broadcast %0 : vector<1x384xf32> to vector<16x384xf32>
    %77 = arith.mulf %75, %76 : vector<16x384xf32>
    %cst_55 = arith.constant 0.000000e+00 : bf16
    %78 = vector.broadcast %cst_55 : bf16 to vector<16x640xbf16>
    %c0_56 = arith.constant 0 : index
    %c0_57 = arith.constant 0 : index
    %79 = vector.load %arg16[%c0_56, %c0_57] : memref<16x640xbf16, #tpu.memory_space<vmem>>, vector<16x640xbf16>
    tpu.vector_store %arg16[%c0_56, %c0_57], %78 {strides = array<i32>} : memref<16x640xbf16, #tpu.memory_space<vmem>>, vector<16x640xbf16>,
    %80 = vector.extract_strided_slice %77 {offsets = [0, 0], sizes = [16, 288], strides = [1, 1]} : vector<16x384xf32> to vector<16x288xf32>
    %81 = arith.truncf %80 : vector<16x288xf32> to vector<16x288xbf16>
    %c0_58 = arith.constant 0 : index
    %c128 = arith.constant 128 : index
    %82 = vector.load %arg16[%c0_58, %c128] : memref<16x640xbf16, #tpu.memory_space<vmem>>, vector<16x288xbf16>
    tpu.vector_store %arg16[%c0_58, %c128], %81 {strides = array<i32>} : memref<16x640xbf16, #tpu.memory_space<vmem>>, vector<16x288xbf16>,
    %c0_59 = arith.constant 0 : index
    %c109 = arith.constant 109 : index
    %83 = vector.load %arg16[%c0_59, %c109] : memref<16x640xbf16, #tpu.memory_space<vmem>>, vector<16x384xbf16>
    %c0_60 = arith.constant 0 : index
    %c0_61 = arith.constant 0 : index
    %84 = vector.load %arg17[%c0_60, %c0_61] : memref<144x384xbf16, #tpu.memory_space<vmem>>, vector<16x384xbf16>
    tpu.vector_store %arg17[%c0_60, %c0_61], %83 {strides = array<i32>} : memref<144x384xbf16, #tpu.memory_space<vmem>>, vector<16x384xbf16>,
    %c0_62 = arith.constant 0 : index
    %c110 = arith.constant 110 : index
    %85 = vector.load %arg16[%c0_62, %c110] : memref<16x640xbf16, #tpu.memory_space<vmem>>, vector<16x384xbf16>
    %c16_63 = arith.constant 16 : index
    %c0_64 = arith.constant 0 : index
    %86 = vector.load %arg17[%c16_63, %c0_64] : memref<144x384xbf16, #tpu.memory_space<vmem>>, vector<16x384xbf16>
    tpu.vector_store %arg17[%c16_63, %c0_64], %85 {strides = array<i32>} : memref<144x384xbf16, #tpu.memory_space<vmem>>, vector<16x384xbf16>,
    %c0_65 = arith.constant 0 : index
    %c111 = arith.constant 111 : index
    %87 = vector.load %arg16[%c0_65, %c111] : memref<16x640xbf16, #tpu.memory_space<vmem>>, vector<16x384xbf16>
    %c32_66 = arith.constant 32 : index
    %c0_67 = arith.constant 0 : index
    %88 = vector.load %arg17[%c32_66, %c0_67] : memref<144x384xbf16, #tpu.memory_space<vmem>>, vector<16x384xbf16>
    tpu.vector_store %arg17[%c32_66, %c0_67], %87 {strides = array<i32>} : memref<144x384xbf16, #tpu.memory_space<vmem>>, vector<16x384xbf16>,
    %c0_68 = arith.constant 0 : index
    %c127 = arith.constant 127 : index
    %89 = vector.load %arg16[%c0_68, %c127] : memref<16x640xbf16, #tpu.memory_space<vmem>>, vector<16x384xbf16>
    %c48_69 = arith.constant 48 : index
    %c0_70 = arith.constant 0 : index
    %90 = vector.load %arg17[%c48_69, %c0_70] : memref<144x384xbf16, #tpu.memory_space<vmem>>, vector<16x384xbf16>
    tpu.vector_store %arg17[%c48_69, %c0_70], %89 {strides = array<i32>} : memref<144x384xbf16, #tpu.memory_space<vmem>>, vector<16x384xbf16>,
    %c0_71 = arith.constant 0 : index
    %c128_72 = arith.constant 128 : index
    %91 = vector.load %arg16[%c0_71, %c128_72] : memref<16x640xbf16, #tpu.memory_space<vmem>>, vector<16x384xbf16>
    %c64_73 = arith.constant 64 : index
    %c0_74 = arith.constant 0 : index
    %92 = vector.load %arg17[%c64_73, %c0_74] : memref<144x384xbf16, #tpu.memory_space<vmem>>, vector<16x384xbf16>
    tpu.vector_store %arg17[%c64_73, %c0_74], %91 {strides = array<i32>} : memref<144x384xbf16, #tpu.memory_space<vmem>>, vector<16x384xbf16>,
    %c0_75 = arith.constant 0 : index
    %c129 = arith.constant 129 : index
    %93 = vector.load %arg16[%c0_75, %c129] : memref<16x640xbf16, #tpu.memory_space<vmem>>, vector<16x384xbf16>
    %c80 = arith.constant 80 : index
    %c0_76 = arith.constant 0 : index
    %94 = vector.load %arg17[%c80, %c0_76] : memref<144x384xbf16, #tpu.memory_space<vmem>>, vector<16x384xbf16>
    tpu.vector_store %arg17[%c80, %c0_76], %93 {strides = array<i32>} : memref<144x384xbf16, #tpu.memory_space<vmem>>, vector<16x384xbf16>,
    %c0_77 = arith.constant 0 : index
    %c145 = arith.constant 145 : index
    %95 = vector.load %arg16[%c0_77, %c145] : memref<16x640xbf16, #tpu.memory_space<vmem>>, vector<16x384xbf16>
    %c96 = arith.constant 96 : index
    %c0_78 = arith.constant 0 : index
    %96 = vector.load %arg17[%c96, %c0_78] : memref<144x384xbf16, #tpu.memory_space<vmem>>, vector<16x384xbf16>
    tpu.vector_store %arg17[%c96, %c0_78], %95 {strides = array<i32>} : memref<144x384xbf16, #tpu.memory_space<vmem>>, vector<16x384xbf16>,
    %c0_79 = arith.constant 0 : index
    %c146 = arith.constant 146 : index
    %97 = vector.load %arg16[%c0_79, %c146] : memref<16x640xbf16, #tpu.memory_space<vmem>>, vector<16x384xbf16>
    %c112 = arith.constant 112 : index
    %c0_80 = arith.constant 0 : index
    %98 = vector.load %arg17[%c112, %c0_80] : memref<144x384xbf16, #tpu.memory_space<vmem>>, vector<16x384xbf16>
    tpu.vector_store %arg17[%c112, %c0_80], %97 {strides = array<i32>} : memref<144x384xbf16, #tpu.memory_space<vmem>>, vector<16x384xbf16>,
    %c0_81 = arith.constant 0 : index
    %c147 = arith.constant 147 : index
    %99 = vector.load %arg16[%c0_81, %c147] : memref<16x640xbf16, #tpu.memory_space<vmem>>, vector<16x384xbf16>
    %c128_82 = arith.constant 128 : index
    %c0_83 = arith.constant 0 : index
    %100 = vector.load %arg17[%c128_82, %c0_83] : memref<144x384xbf16, #tpu.memory_space<vmem>>, vector<16x384xbf16>
    tpu.vector_store %arg17[%c128_82, %c0_83], %99 {strides = array<i32>} : memref<144x384xbf16, #tpu.memory_space<vmem>>, vector<16x384xbf16>,
    %c0_84 = arith.constant 0 : index
    %c0_85 = arith.constant 0 : index
    %101 = vector.load %arg6[%c0_84, %c0_85] : memref<16x144xbf16, #tpu.memory_space<vmem>>, vector<16x144xbf16>
    %c0_86 = arith.constant 0 : index
    %c0_87 = arith.constant 0 : index
    %102 = vector.load %arg17[%c0_86, %c0_87] : memref<144x384xbf16, #tpu.memory_space<vmem>>, vector<144x384xbf16>
    %cst_88 = arith.constant dense<0.000000e+00> : vector<16x384xf32>
    %103 = tpu.matmul %101, %102, %cst_88 {dimension_numbers = #tpu.dot_dimension_numbers<[1], [0], [0], [1], [0, 0, 1, 1], [], []>} : vector<16x144xbf16>, vector<144x384xbf16>, vector<16x384xf32> -> vector<16x384xf32>
    %c0_89 = arith.constant 0 : index
    %c0_90 = arith.constant 0 : index
    %104 = vector.load %arg7[%c0_89, %c0_90] : memref<16x1xf32, #tpu.memory_space<vmem>>, vector<16x1xf32>
    %105 = vector.broadcast %104 : vector<16x1xf32> to vector<16x384xf32>
    %106 = arith.addf %103, %105 : vector<16x384xf32>
    %c0_91 = arith.constant 0 : index
    %c0_92 = arith.constant 0 : index
    %107 = vector.load %arg8[%c0_91, %c0_92] : memref<16x1xf32, #tpu.memory_space<vmem>>, vector<16x1xf32>
    %c0_93 = arith.constant 0 : index
    %c0_94 = arith.constant 0 : index
    %108 = vector.load %arg9[%c0_93, %c0_94] : memref<16x1xf32, #tpu.memory_space<vmem>>, vector<16x1xf32>
    %c0_95 = arith.constant 0 : index
    %c0_96 = arith.constant 0 : index
    %109 = vector.load %arg10[%c0_95, %c0_96] : memref<16x16xf32, #tpu.memory_space<vmem>>, vector<16x16xf32>
    %110 = vector.broadcast %0 : vector<1x384xf32> to vector<16x384xf32>
    %111 = arith.mulf %106, %110 : vector<16x384xf32>
    %cst_97 = arith.constant dense<0.000000e+00> : vector<16xf32>
    %112 = vector.multi_reduction <add>, %111, %cst_97 [1] : vector<16x384xf32> to vector<16xf32>
    %113 = vector.shape_cast %112 : vector<16xf32> to vector<16x1xf32>
    %cst_98 = arith.constant dense<0.000000e+00> : vector<16x1xf32>
    %114 = tpu.matmul %109, %113, %cst_98 {dimension_numbers = #tpu.dot_dimension_numbers<[1], [0], [0], [1], [0, 0, 1, 1], [], []>} : vector<16x16xf32>, vector<16x1xf32>, vector<16x1xf32> -> vector<16x1xf32>
    %115 = vector.broadcast %114 : vector<16x1xf32> to vector<16x384xf32>
    %116 = arith.subf %106, %115 : vector<16x384xf32>
    %117 = arith.mulf %116, %116 : vector<16x384xf32>
    %118 = vector.broadcast %0 : vector<1x384xf32> to vector<16x384xf32>
    %119 = arith.mulf %117, %118 : vector<16x384xf32>
    %cst_99 = arith.constant dense<0.000000e+00> : vector<16xf32>
    %120 = vector.multi_reduction <add>, %119, %cst_99 [1] : vector<16x384xf32> to vector<16xf32>
    %121 = vector.shape_cast %120 : vector<16xf32> to vector<16x1xf32>
    %cst_100 = arith.constant dense<0.000000e+00> : vector<16x1xf32>
    %122 = tpu.matmul %109, %121, %cst_100 {dimension_numbers = #tpu.dot_dimension_numbers<[1], [0], [0], [1], [0, 0, 1, 1], [], []>} : vector<16x16xf32>, vector<16x1xf32>, vector<16x1xf32> -> vector<16x1xf32>
    %cst_101 = arith.constant 9.99999974E-6 : f32
    %123 = vector.broadcast %cst_101 : f32 to vector<16x1xf32>
    %124 = arith.addf %122, %123 : vector<16x1xf32>
    %125 = math.rsqrt %124 : vector<16x1xf32>
    %126 = vector.broadcast %125 : vector<16x1xf32> to vector<16x384xf32>
    %127 = arith.mulf %116, %126 : vector<16x384xf32>
    %128 = vector.broadcast %107 : vector<16x1xf32> to vector<16x384xf32>
    %129 = arith.mulf %127, %128 : vector<16x384xf32>
    %130 = vector.broadcast %108 : vector<16x1xf32> to vector<16x384xf32>
    %131 = arith.addf %129, %130 : vector<16x384xf32>
    %cst_102 = arith.constant 2.000000e+01 : f32
    %132 = vector.broadcast %cst_102 : f32 to vector<16x384xf32>
    %133 = arith.minimumf %131, %132 : vector<16x384xf32>
    %134 = math.exp %133 : vector<16x384xf32>
    %cst_103 = arith.constant 2.000000e+00 : f32
    %135 = vector.broadcast %cst_103 : f32 to vector<16x384xf32>
    %136 = arith.addf %134, %135 : vector<16x384xf32>
    %137 = arith.mulf %134, %136 : vector<16x384xf32>
    %cst_104 = arith.constant 2.000000e+00 : f32
    %138 = vector.broadcast %cst_104 : f32 to vector<16x384xf32>
    %139 = arith.addf %137, %138 : vector<16x384xf32>
    %140 = tpu.reciprocal %139 {approx = true} : vector<16x384xf32> -> vector<16x384xf32>
    %141 = arith.mulf %137, %140 : vector<16x384xf32>
    %cst_105 = arith.constant 2.000000e+01 : f32
    %142 = vector.broadcast %cst_105 : f32 to vector<16x384xf32>
    %143 = arith.cmpf ogt, %131, %142 : vector<16x384xf32>
    %cst_106 = arith.constant 1.000000e+00 : f32
    %144 = vector.broadcast %cst_106 : f32 to vector<16x384xf32>
    %145 = arith.select %143, %144, %141 : vector<16x384xi1>, vector<16x384xf32>
    %146 = arith.mulf %131, %145 : vector<16x384xf32>
    %c0_107 = arith.constant 0 : index
    %c0_108 = arith.constant 0 : index
    %c19_109 = arith.constant 19 : index
    %147 = vector.load %arg1[%c0_107, %c0_108, %c19_109] : memref<1x4x512xbf16, #tpu.memory_space<vmem>>, vector<1x4x384xbf16>
    %148 = vector.shape_cast %147 : vector<1x4x384xbf16> to vector<4x384xbf16>
    %c0_110 = arith.constant 0 : index
    %c0_111 = arith.constant 0 : index
    %149 = vector.load %arg12[%c0_110, %c0_111] : memref<16x4xbf16, #tpu.memory_space<vmem>>, vector<16x4xbf16>
    %cst_112 = arith.constant dense<0.000000e+00> : vector<16x384xf32>
    %150 = tpu.matmul %149, %148, %cst_112 {dimension_numbers = #tpu.dot_dimension_numbers<[1], [0], [0], [1], [0, 0, 1, 1], [], []>} : vector<16x4xbf16>, vector<4x384xbf16>, vector<16x384xf32> -> vector<16x384xf32>
    %c0_113 = arith.constant 0 : index
    %c0_114 = arith.constant 0 : index
    %151 = vector.load %arg13[%c0_113, %c0_114] : memref<16x1xf32, #tpu.memory_space<vmem>>, vector<16x1xf32>
    %152 = vector.broadcast %151 : vector<16x1xf32> to vector<16x384xf32>
    %153 = arith.addf %150, %152 : vector<16x384xf32>
    %154 = arith.addf %146, %153 : vector<16x384xf32>
    %c0_115 = arith.constant 0 : index
    %c0_116 = arith.constant 0 : index
    %c0_117 = arith.constant 0 : index
    %155 = vector.load %arg14[%c0_115, %c0_116, %c0_117] : memref<1x16x384xf32, #tpu.memory_space<vmem>>, vector<1x16x384xf32>
    %156 = vector.shape_cast %155 : vector<1x16x384xf32> to vector<16x384xf32>
    %157 = vector.shape_cast %154 : vector<16x384xf32> to vector<1x16x384xf32>
    tpu.vector_store %arg14[%c0_115, %c0_116, %c0_117], %157 {strides = array<i32>} : memref<1x16x384xf32, #tpu.memory_space<vmem>>, vector<1x16x384xf32>,
    return
  }
  func.func @transform_0(%arg0: i32) -> (i32, i32, i32) {
    %c0_i32 = arith.constant 0 : i32
    %c0_i32_0 = arith.constant 0 : i32
    %c0_i32_1 = arith.constant 0 : i32
    return %arg0, %c0_i32, %c0_i32_0 : i32, i32, i32
  }
  func.func @transform_1(%arg0: i32) -> (i32, i32) {
    %c0_i32 = arith.constant 0 : i32
    %c0_i32_0 = arith.constant 0 : i32
    %c0_i32_1 = arith.constant 0 : i32
    return %c0_i32, %c0_i32_0 : i32, i32
  }
  func.func @transform_2(%arg0: i32) -> (i32, i32) {
    %c0_i32 = arith.constant 0 : i32
    %c0_i32_0 = arith.constant 0 : i32
    %c0_i32_1 = arith.constant 0 : i32
    return %c0_i32, %c0_i32_0 : i32, i32
  }
  func.func @transform_3(%arg0: i32) -> (i32, i32) {
    %c0_i32 = arith.constant 0 : i32
    %c0_i32_0 = arith.constant 0 : i32
    %c0_i32_1 = arith.constant 0 : i32
    return %c0_i32, %c0_i32_0 : i32, i32
  }
  func.func @transform_4(%arg0: i32) -> (i32, i32) {
    %c0_i32 = arith.constant 0 : i32
    %c0_i32_0 = arith.constant 0 : i32
    %c0_i32_1 = arith.constant 0 : i32
    return %c0_i32, %c0_i32_0 : i32, i32
  }
  func.func @transform_5(%arg0: i32) -> (i32, i32) {
    %c0_i32 = arith.constant 0 : i32
    %c0_i32_0 = arith.constant 0 : i32
    %c0_i32_1 = arith.constant 0 : i32
    return %c0_i32, %c0_i32_0 : i32, i32
  }
  func.func @transform_6(%arg0: i32) -> (i32, i32) {
    %c0_i32 = arith.constant 0 : i32
    %c0_i32_0 = arith.constant 0 : i32
    %c0_i32_1 = arith.constant 0 : i32
    return %c0_i32, %c0_i32_0 : i32, i32
  }
  func.func @transform_7(%arg0: i32) -> (i32, i32) {
    %c0_i32 = arith.constant 0 : i32
    %c0_i32_0 = arith.constant 0 : i32
    %c0_i32_1 = arith.constant 0 : i32
    return %c0_i32, %c0_i32_0 : i32, i32
  }
  func.func @transform_8(%arg0: i32) -> (i32, i32) {
    %c0_i32 = arith.constant 0 : i32
    %c0_i32_0 = arith.constant 0 : i32
    %c0_i32_1 = arith.constant 0 : i32
    return %c0_i32, %c0_i32_0 : i32, i32
  }
  func.func @transform_9(%arg0: i32) -> (i32, i32) {
    %c0_i32 = arith.constant 0 : i32
    %c0_i32_0 = arith.constant 0 : i32
    %c0_i32_1 = arith.constant 0 : i32
    return %c0_i32, %c0_i32_0 : i32, i32
  }
  func.func @transform_10(%arg0: i32) -> (i32, i32) {
    %c0_i32 = arith.constant 0 : i32
    %c0_i32_0 = arith.constant 0 : i32
    %c0_i32_1 = arith.constant 0 : i32
    return %c0_i32, %c0_i32_0 : i32, i32
  }
  func.func @transform_11(%arg0: i32) -> (i32, i32) {
    %c0_i32 = arith.constant 0 : i32
    %c0_i32_0 = arith.constant 0 : i32
    %c0_i32_1 = arith.constant 0 : i32
    return %c0_i32, %c0_i32_0 : i32, i32
  }
  func.func @transform_12(%arg0: i32) -> (i32, i32) {
    %c0_i32 = arith.constant 0 : i32
    %c0_i32_0 = arith.constant 0 : i32
    %c0_i32_1 = arith.constant 0 : i32
    return %c0_i32, %c0_i32_0 : i32, i32
  }
  func.func @transform_13(%arg0: i32) -> (i32, i32, i32) {
    %c0_i32 = arith.constant 0 : i32
    %c0_i32_0 = arith.constant 0 : i32
    %c0_i32_1 = arith.constant 0 : i32
    return %arg0, %c0_i32, %c0_i32_0 : i32, i32, i32
  }
}

</mosaic_0001>

<llo_original>
// kernel: residual_block2d_forward.1
$region0: #{residual_block2d_forward.1}
  #allocation0 [shape = 'u32[]', space=smem, size = 0x4, offset = 0x4, fixed_abs, tag = 'smem constant byte address 0x4 - core index']
  #allocation1 [shape = 'u32[144,128]{1,0:T(1,128)}', space=vmem, size = 0x12000, scoped, tag = 'internal scratch']
  #allocation2 [shape = 'bf16[72,384]{1,0:T(8,128)(2,1)}', space=vmem, size = 0xd800, scoped, tag = 'scratch operand']
  #allocation3 [shape = 'bf16[16,640]{1,0:T(16,128)(2,1)}', space=vmem, size = 0x5000, scoped, tag = 'scratch operand']
  #allocation4 [shape = 'bf16[144,384]{1,0:T(16,128)(2,1)}', space=vmem, size = 0x1b000, scoped, tag = 'scratch operand']
  %s0 = inlined_call_operand.vmem [shape: bf16[2,4,512], index: 0, kind: input, shape index: {}]
  %s1 = inlined_call_operand.vmem [shape: bf16[16,72], index: 1, kind: input, shape index: {}]
  %s2 = inlined_call_operand.vmem [shape: f32[16,1], index: 2, kind: input, shape index: {}]
  %s3 = inlined_call_operand.vmem [shape: f32[16,1], index: 3, kind: input, shape index: {}]
  %s4 = inlined_call_operand.vmem [shape: f32[16,1], index: 4, kind: input, shape index: {}]
  %s5 = inlined_call_operand.vmem [shape: bf16[16,144], index: 5, kind: input, shape index: {}]
  %s6 = inlined_call_operand.vmem [shape: f32[16,1], index: 6, kind: input, shape index: {}]
  %s7 = inlined_call_operand.vmem [shape: f32[16,1], index: 7, kind: input, shape index: {}]
  %s8 = inlined_call_operand.vmem [shape: f32[16,1], index: 8, kind: input, shape index: {}]
  %s9 = inlined_call_operand.vmem [shape: f32[16,16], index: 9, kind: input, shape index: {}]
  %s10 = inlined_call_operand.vmem [shape: f32[1,384], index: 10, kind: input, shape index: {}]
  %s11 = inlined_call_operand.vmem [shape: bf16[16,4], index: 11, kind: input, shape index: {}]
  %s12 = inlined_call_operand.vmem [shape: f32[16,1], index: 12, kind: input, shape index: {}]
  %s13 = inlined_call_operand.vmem [shape: f32[2,16,384], index: 13, kind: output, shape index: {}]
  %s14 = sld [smem:[#allocation0]]
  $region85: #{residual_block2d_forward.1} parent=0
    _
  %s16 = ssub.s32 1, %s14
  %s17 = scalar_select 0, %s16, %s14
  loop: start=0, step=1, limit=4
  $region2: #{residual_block2d_forward.1} parent=0 // loop_pre_header
    _
  $region3: #{residual_block2d_forward.1} parent=0 // loop_header
    %s19 = sphi 0, %s23
    %p20 = scmp.ge.s32.totalorder %s19, 4
    %s29 = sphi 0, %s31
    %s32 = sphi 0, %s29
    %s33 = sphi 0, %s32
    %s49 = sphi 0, %s33
    %s53 = sphi 0, %s53
    %s55 = sphi 0, %s53
    %s56 = sphi 0, %s55
    %s70 = sphi 0, %s56
    %s74 = sphi 0, %s74
    %s76 = sphi 0, %s74
    %s77 = sphi 0, %s76
    %s91 = sphi 0, %s77
    %s95 = sphi 0, %s95
    %s97 = sphi 0, %s95
    %s98 = sphi 0, %s97
    %s112 = sphi 0, %s98
    %s116 = sphi 0, %s116
    %s118 = sphi 0, %s116
    %s119 = sphi 0, %s118
    %s133 = sphi 0, %s119
    %s137 = sphi 0, %s137
    %s139 = sphi 0, %s137
    %s140 = sphi 0, %s139
    %s154 = sphi 0, %s140
    %s158 = sphi 0, %s158
    %s160 = sphi 0, %s158
    %s161 = sphi 0, %s160
    %s175 = sphi 0, %s161
    %s179 = sphi 0, %s179
    %s181 = sphi 0, %s179
    %s182 = sphi 0, %s181
    %s196 = sphi 0, %s182
    %s200 = sphi 0, %s200
    %s202 = sphi 0, %s200
    %s203 = sphi 0, %s202
    %s217 = sphi 0, %s203
    %s221 = sphi 0, %s221
    %s223 = sphi 0, %s221
    %s224 = sphi 0, %s223
    %s238 = sphi 0, %s224
    %s242 = sphi 0, %s242
    %s244 = sphi 0, %s242
    %s245 = sphi 0, %s244
    %s259 = sphi 0, %s245
    %s263 = sphi 0, %s263
    %s265 = sphi 0, %s263
    %s266 = sphi 0, %s265
    %s280 = sphi 0, %s266
    %s284 = sphi 0, %s284
    %s286 = sphi 0, %s284
    %s287 = sphi 0, %s286
    %s301 = sphi 0, %s287
    %s307 = sphi 0, %s309
    %s310 = sphi 0, %s307
    %s311 = sphi 0, %s310
    %s327 = sphi 0, %s311
  $region4: #{residual_block2d_forward.1} parent=0 // loop_header_branch
    %22 = sbr.rel (%p20) target = $region8
  $region5: #{residual_block2d_forward.1} parent=0 // loop_body
    %s24 = ssub.s32 %s19, 1
    %s25 = ssub.s32 %s19, 2
    %s26 = sadd.s32 %s19, 1
    %s27 = ssub.s32 %s19, %s26
    %p28 = scmp.eq.s32.totalorder %s27, 0
    %s30 = sadd.s32 %s29, 1
    %s31 = scalar_select %p28, %s29, %s30
    %p34 = pneg %p28
    %p35 = scmp.eq.s32.totalorder %s19, 1
    %p36 = por %p34, %p35
    %p37 = scmp.ne.s32.totalorder %s29, %s32
    %p38 = scmp.eq.s32.totalorder %s19, 0
    %p39 = por %p37, %p38
    %p40 = scmp.ne.s32.totalorder %s29, %s32
    %p41 = scmp.eq.s32.totalorder %s24, 1
    %p42 = por %p40, %p41
    %p43 = scmp.ne.s32.totalorder %s32, %s33
    %p44 = scmp.eq.s32.totalorder %s24, 0
    %p45 = por %p43, %p44
    %p46 = scmp.ne.s32.totalorder %s32, %s33
    %p47 = scmp.eq.s32.totalorder %s25, 1
    %p48 = por %p46, %p47
    %p50 = scmp.ne.s32.totalorder %s33, %s49
    %p51 = scmp.eq.s32.totalorder %s25, 0
    %p52 = por %p50, %p51
    %s54 = sadd.s32 %s53, 1
    %p57 = scmp.eq.s32.totalorder %s19, 1
    %p58 = scmp.ne.s32.totalorder %s53, %s55
    %p59 = scmp.eq.s32.totalorder %s19, 0
    %p60 = por %p58, %p59
    %p61 = scmp.ne.s32.totalorder %s53, %s55
    %p62 = scmp.eq.s32.totalorder %s24, 1
    %p63 = por %p61, %p62
    %p64 = scmp.ne.s32.totalorder %s55, %s56
    %p65 = scmp.eq.s32.totalorder %s24, 0
    %p66 = por %p64, %p65
    %p67 = scmp.ne.s32.totalorder %s55, %s56
    %p68 = scmp.eq.s32.totalorder %s25, 1
    %p69 = por %p67, %p68
    %p71 = scmp.ne.s32.totalorder %s56, %s70
    %p72 = scmp.eq.s32.totalorder %s25, 0
    %p73 = por %p71, %p72
    %s75 = sadd.s32 %s74, 1
    %p78 = scmp.eq.s32.totalorder %s19, 1
    %p79 = scmp.ne.s32.totalorder %s74, %s76
    %p80 = scmp.eq.s32.totalorder %s19, 0
    %p81 = por %p79, %p80
    %p82 = scmp.ne.s32.totalorder %s74, %s76
    %p83 = scmp.eq.s32.totalorder %s24, 1
    %p84 = por %p82, %p83
    %p85 = scmp.ne.s32.totalorder %s76, %s77
    %p86 = scmp.eq.s32.totalorder %s24, 0
    %p87 = por %p85, %p86
    %p88 = scmp.ne.s32.totalorder %s76, %s77
    %p89 = scmp.eq.s32.totalorder %s25, 1
    %p90 = por %p88, %p89
    %p92 = scmp.ne.s32.totalorder %s77, %s91
    %p93 = scmp.eq.s32.totalorder %s25, 0
    %p94 = por %p92, %p93
    %s96 = sadd.s32 %s95, 1
    %p99 = scmp.eq.s32.totalorder %s19, 1
    %p100 = scmp.ne.s32.totalorder %s95, %s97
    %p101 = scmp.eq.s32.totalorder %s19, 0
    %p102 = por %p100, %p101
    %p103 = scmp.ne.s32.totalorder %s95, %s97
    %p104 = scmp.eq.s32.totalorder %s24, 1
    %p105 = por %p103, %p104
    %p106 = scmp.ne.s32.totalorder %s97, %s98
    %p107 = scmp.eq.s32.totalorder %s24, 0
    %p108 = por %p106, %p107
    %p109 = scmp.ne.s32.totalorder %s97, %s98
    %p110 = scmp.eq.s32.totalorder %s25, 1
    %p111 = por %p109, %p110
    %p113 = scmp.ne.s32.totalorder %s98, %s112
    %p114 = scmp.eq.s32.totalorder %s25, 0
    %p115 = por %p113, %p114
    %s117 = sadd.s32 %s116, 1
    %p120 = scmp.eq.s32.totalorder %s19, 1
    %p121 = scmp.ne.s32.totalorder %s116, %s118
    %p122 = scmp.eq.s32.totalorder %s19, 0
    %p123 = por %p121, %p122
    %p124 = scmp.ne.s32.totalorder %s116, %s118
    %p125 = scmp.eq.s32.totalorder %s24, 1
    %p126 = por %p124, %p125
    %p127 = scmp.ne.s32.totalorder %s118, %s119
    %p128 = scmp.eq.s32.totalorder %s24, 0
    %p129 = por %p127, %p128
    %p130 = scmp.ne.s32.totalorder %s118, %s119
    %p131 = scmp.eq.s32.totalorder %s25, 1
    %p132 = por %p130, %p131
    %p134 = scmp.ne.s32.totalorder %s119, %s133
    %p135 = scmp.eq.s32.totalorder %s25, 0
    %p136 = por %p134, %p135
    %s138 = sadd.s32 %s137, 1
    %p141 = scmp.eq.s32.totalorder %s19, 1
    %p142 = scmp.ne.s32.totalorder %s137, %s139
    %p143 = scmp.eq.s32.totalorder %s19, 0
    %p144 = por %p142, %p143
    %p145 = scmp.ne.s32.totalorder %s137, %s139
    %p146 = scmp.eq.s32.totalorder %s24, 1
    %p147 = por %p145, %p146
    %p148 = scmp.ne.s32.totalorder %s139, %s140
    %p149 = scmp.eq.s32.totalorder %s24, 0
    %p150 = por %p148, %p149
    %p151 = scmp.ne.s32.totalorder %s139, %s140
    %p152 = scmp.eq.s32.totalorder %s25, 1
    %p153 = por %p151, %p152
    %p155 = scmp.ne.s32.totalorder %s140, %s154
    %p156 = scmp.eq.s32.totalorder %s25, 0
    %p157 = por %p155, %p156
    %s159 = sadd.s32 %s158, 1
    %p162 = scmp.eq.s32.totalorder %s19, 1
    %p163 = scmp.ne.s32.totalorder %s158, %s160
    %p164 = scmp.eq.s32.totalorder %s19, 0
    %p165 = por %p163, %p164
    %p166 = scmp.ne.s32.totalorder %s158, %s160
    %p167 = scmp.eq.s32.totalorder %s24, 1
    %p168 = por %p166, %p167
    %p169 = scmp.ne.s32.totalorder %s160, %s161
    %p170 = scmp.eq.s32.totalorder %s24, 0
    %p171 = por %p169, %p170
    %p172 = scmp.ne.s32.totalorder %s160, %s161
    %p173 = scmp.eq.s32.totalorder %s25, 1
    %p174 = por %p172, %p173
    %p176 = scmp.ne.s32.totalorder %s161, %s175
    %p177 = scmp.eq.s32.totalorder %s25, 0
    %p178 = por %p176, %p177
    %s180 = sadd.s32 %s179, 1
    %p183 = scmp.eq.s32.totalorder %s19, 1
    %p184 = scmp.ne.s32.totalorder %s179, %s181
    %p185 = scmp.eq.s32.totalorder %s19, 0
    %p186 = por %p184, %p185
    %p187 = scmp.ne.s32.totalorder %s179, %s181
    %p188 = scmp.eq.s32.totalorder %s24, 1
    %p189 = por %p187, %p188
    %p190 = scmp.ne.s32.totalorder %s181, %s182
    %p191 = scmp.eq.s32.totalorder %s24, 0
    %p192 = por %p190, %p191
    %p193 = scmp.ne.s32.totalorder %s181, %s182
    %p194 = scmp.eq.s32.totalorder %s25, 1
    %p195 = por %p193, %p194
    %p197 = scmp.ne.s32.totalorder %s182, %s196
    %p198 = scmp.eq.s32.totalorder %s25, 0
    %p199 = por %p197, %p198
    %s201 = sadd.s32 %s200, 1
    %p204 = scmp.eq.s32.totalorder %s19, 1
    %p205 = scmp.ne.s32.totalorder %s200, %s202
    %p206 = scmp.eq.s32.totalorder %s19, 0
    %p207 = por %p205, %p206
    %p208 = scmp.ne.s32.totalorder %s200, %s202
    %p209 = scmp.eq.s32.totalorder %s24, 1
    %p210 = por %p208, %p209
    %p211 = scmp.ne.s32.totalorder %s202, %s203
    %p212 = scmp.eq.s32.totalorder %s24, 0
    %p213 = por %p211, %p212
    %p214 = scmp.ne.s32.totalorder %s202, %s203
    %p215 = scmp.eq.s32.totalorder %s25, 1
    %p216 = por %p214, %p215
    %p218 = scmp.ne.s32.totalorder %s203, %s217
    %p219 = scmp.eq.s32.totalorder %s25, 0
    %p220 = por %p218, %p219
    %s222 = sadd.s32 %s221, 1
    %p225 = scmp.eq.s32.totalorder %s19, 1
    %p226 = scmp.ne.s32.totalorder %s221, %s223
    %p227 = scmp.eq.s32.totalorder %s19, 0
    %p228 = por %p226, %p227
    %p229 = scmp.ne.s32.totalorder %s221, %s223
    %p230 = scmp.eq.s32.totalorder %s24, 1
    %p231 = por %p229, %p230
    %p232 = scmp.ne.s32.totalorder %s223, %s224
    %p233 = scmp.eq.s32.totalorder %s24, 0
    %p234 = por %p232, %p233
    %p235 = scmp.ne.s32.totalorder %s223, %s224
    %p236 = scmp.eq.s32.totalorder %s25, 1
    %p237 = por %p235, %p236
    %p239 = scmp.ne.s32.totalorder %s224, %s238
    %p240 = scmp.eq.s32.totalorder %s25, 0
    %p241 = por %p239, %p240
    %s243 = sadd.s32 %s242, 1
    %p246 = scmp.eq.s32.totalorder %s19, 1
    %p247 = scmp.ne.s32.totalorder %s242, %s244
    %p248 = scmp.eq.s32.totalorder %s19, 0
    %p249 = por %p247, %p248
    %p250 = scmp.ne.s32.totalorder %s242, %s244
    %p251 = scmp.eq.s32.totalorder %s24, 1
    %p252 = por %p250, %p251
    %p253 = scmp.ne.s32.totalorder %s244, %s245
    %p254 = scmp.eq.s32.totalorder %s24, 0
    %p255 = por %p253, %p254
    %p256 = scmp.ne.s32.totalorder %s244, %s245
    %p257 = scmp.eq.s32.totalorder %s25, 1
    %p258 = por %p256, %p257
    %p260 = scmp.ne.s32.totalorder %s245, %s259
    %p261 = scmp.eq.s32.totalorder %s25, 0
    %p262 = por %p260, %p261
    %s264 = sadd.s32 %s263, 1
    %p267 = scmp.eq.s32.totalorder %s19, 1
    %p268 = scmp.ne.s32.totalorder %s263, %s265
    %p269 = scmp.eq.s32.totalorder %s19, 0
    %p270 = por %p268, %p269
    %p271 = scmp.ne.s32.totalorder %s263, %s265
    %p272 = scmp.eq.s32.totalorder %s24, 1
    %p273 = por %p271, %p272
    %p274 = scmp.ne.s32.totalorder %s265, %s266
    %p275 = scmp.eq.s32.totalorder %s24, 0
    %p276 = por %p274, %p275
    %p277 = scmp.ne.s32.totalorder %s265, %s266
    %p278 = scmp.eq.s32.totalorder %s25, 1
    %p279 = por %p277, %p278
    %p281 = scmp.ne.s32.totalorder %s266, %s280
    %p282 = scmp.eq.s32.totalorder %s25, 0
    %p283 = por %p281, %p282
    %s285 = sadd.s32 %s284, 1
    %p288 = scmp.eq.s32.totalorder %s19, 1
    %p289 = scmp.ne.s32.totalorder %s284, %s286
    %p290 = scmp.eq.s32.totalorder %s19, 0
    %p291 = por %p289, %p290
    %p292 = scmp.ne.s32.totalorder %s284, %s286
    %p293 = scmp.eq.s32.totalorder %s24, 1
    %p294 = por %p292, %p293
    %p295 = scmp.ne.s32.totalorder %s286, %s287
    %p296 = scmp.eq.s32.totalorder %s24, 0
    %p297 = por %p295, %p296
    %p298 = scmp.ne.s32.totalorder %s286, %s287
    %p299 = scmp.eq.s32.totalorder %s25, 1
    %p300 = por %p298, %p299
    %p302 = scmp.ne.s32.totalorder %s287, %s301
    %p303 = scmp.eq.s32.totalorder %s25, 0
    %p304 = por %p302, %p303
    %s305 = ssub.s32 %s19, %s26
    %p306 = scmp.eq.s32.totalorder %s305, 0
    %s308 = sadd.s32 %s307, 1
    %s309 = scalar_select %p306, %s307, %s308
    %p312 = pneg %p306
    %p313 = scmp.eq.s32.totalorder %s19, 1
    %p314 = por %p312, %p313
    %p315 = scmp.ne.s32.totalorder %s307, %s310
    %p316 = scmp.eq.s32.totalorder %s19, 0
    %p317 = por %p315, %p316
    %p318 = scmp.ne.s32.totalorder %s307, %s310
    %p319 = scmp.eq.s32.totalorder %s24, 1
    %p320 = por %p318, %p319
    %p321 = scmp.ne.s32.totalorder %s310, %s311
    %p322 = scmp.eq.s32.totalorder %s24, 0
    %p323 = por %p321, %p322
    %p324 = scmp.ne.s32.totalorder %s310, %s311
    %p325 = scmp.eq.s32.totalorder %s25, 1
    %p326 = por %p324, %p325
    %p328 = scmp.ne.s32.totalorder %s311, %s327
    %p329 = scmp.eq.s32.totalorder %s25, 0
    %p330 = por %p328, %p329
    %p331 = scmp.le.s32.totalorder 1, %s19
    %p332 = scmp.lt.s32.totalorder %s19, 3
    %p333 = pnand %p331, %p332
    %p334 = pneg %p333
    // Predicated region
    $region9: #{residual_block2d_forward.1} parent=5 // pred_check
      _
    $region10: #{residual_block2d_forward.1} parent=5 // pred_check_branch
      %336 = sbr.rel (%p333) target = $region12
    $region11: #{residual_block2d_forward.1} parent=5 // pred_region
      %s337 = ssub.s32 %s19, 1
      // Predicated region
      $region13: #{residual_block2d_forward.1} parent=11 // pred_check
        %p338 = pneg %p66
      $region14: #{residual_block2d_forward.1} parent=11 // pred_check_branch
        %340 = sbr.rel (%p338) target = $region16
      $region15: #{residual_block2d_forward.1} parent=11 // pred_region
        _
      $region16: #{residual_block2d_forward.1} parent=11 // pred_fallthru
        _
      // Predicated region
      $region17: #{residual_block2d_forward.1} parent=11 // pred_check
        %p341 = pneg %p87
      $region18: #{residual_block2d_forward.1} parent=11 // pred_check_branch
        %343 = sbr.rel (%p341) target = $region20
      $region19: #{residual_block2d_forward.1} parent=11 // pred_region
        _
      $region20: #{residual_block2d_forward.1} parent=11 // pred_fallthru
        _
      // Predicated region
      $region21: #{residual_block2d_forward.1} parent=11 // pred_check
        %p344 = pneg %p108
      $region22: #{residual_block2d_forward.1} parent=11 // pred_check_branch
        %346 = sbr.rel (%p344) target = $region24
      $region23: #{residual_block2d_forward.1} parent=11 // pred_region
        _
      $region24: #{residual_block2d_forward.1} parent=11 // pred_fallthru
        _
      // Predicated region
      $region25: #{residual_block2d_forward.1} parent=11 // pred_check
        %p347 = pneg %p129
      $region26: #{residual_block2d_forward.1} parent=11 // pred_check_branch
        %349 = sbr.rel (%p347) target = $region28
      $region27: #{residual_block2d_forward.1} parent=11 // pred_region
        _
      $region28: #{residual_block2d_forward.1} parent=11 // pred_fallthru
        _
      // Predicated region
      $region29: #{residual_block2d_forward.1} parent=11 // pred_check
        %p350 = pneg %p150
      $region30: #{residual_block2d_forward.1} parent=11 // pred_check_branch
        %352 = sbr.rel (%p350) target = $region32
      $region31: #{residual_block2d_forward.1} parent=11 // pred_region
        _
      $region32: #{residual_block2d_forward.1} parent=11 // pred_fallthru
        _
      // Predicated region
      $region33: #{residual_block2d_forward.1} parent=11 // pred_check
        %p353 = pneg %p171
      $region34: #{residual_block2d_forward.1} parent=11 // pred_check_branch
        %355 = sbr.rel (%p353) target = $region36
      $region35: #{residual_block2d_forward.1} parent=11 // pred_region
        _
      $region36: #{residual_block2d_forward.1} parent=11 // pred_fallthru
        _
      // Predicated region
      $region37: #{residual_block2d_forward.1} parent=11 // pred_check
        %p356 = pneg %p192
      $region38: #{residual_block2d_forward.1} parent=11 // pred_check_branch
        %358 = sbr.rel (%p356) target = $region40
      $region39: #{residual_block2d_forward.1} parent=11 // pred_region
        _
      $region40: #{residual_block2d_forward.1} parent=11 // pred_fallthru
        _
      // Predicated region
      $region41: #{residual_block2d_forward.1} parent=11 // pred_check
        %p359 = pneg %p213
      $region42: #{residual_block2d_forward.1} parent=11 // pred_check_branch
        %361 = sbr.rel (%p359) target = $region44
      $region43: #{residual_block2d_forward.1} parent=11 // pred_region
        _
      $region44: #{residual_block2d_forward.1} parent=11 // pred_fallthru
        _
      // Predicated region
      $region45: #{residual_block2d_forward.1} parent=11 // pred_check
        %p362 = pneg %p234
      $region46: #{residual_block2d_forward.1} parent=11 // pred_check_branch
        %364 = sbr.rel (%p362) target = $region48
      $region47: #{residual_block2d_forward.1} parent=11 // pred_region
        _
      $region48: #{residual_block2d_forward.1} parent=11 // pred_fallthru
        _
      // Predicated region
      $region49: #{residual_block2d_forward.1} parent=11 // pred_check
        %p365 = pneg %p255
      $region50: #{residual_block2d_forward.1} parent=11 // pred_check_branch
        %367 = sbr.rel (%p365) target = $region52
      $region51: #{residual_block2d_forward.1} parent=11 // pred_region
        _
      $region52: #{residual_block2d_forward.1} parent=11 // pred_fallthru
        _
      // Predicated region
      $region53: #{residual_block2d_forward.1} parent=11 // pred_check
        %p368 = pneg %p276
      $region54: #{residual_block2d_forward.1} parent=11 // pred_check_branch
        %370 = sbr.rel (%p368) target = $region56
      $region55: #{residual_block2d_forward.1} parent=11 // pred_region
        _
      $region56: #{residual_block2d_forward.1} parent=11 // pred_fallthru
        _
      // Predicated region
      $region57: #{residual_block2d_forward.1} parent=11 // pred_check
        %p371 = pneg %p297
      $region58: #{residual_block2d_forward.1} parent=11 // pred_check_branch
        %373 = sbr.rel (%p371) target = $region60
      $region59: #{residual_block2d_forward.1} parent=11 // pred_region
        _
      $region60: #{residual_block2d_forward.1} parent=11 // pred_fallthru
        _
    $region12: #{residual_block2d_forward.1} parent=5 // pred_fallthru
      _
    %p374 = scmp.lt.s32.totalorder %s19, 2
    // Predicated region
    $region61: #{residual_block2d_forward.1} parent=5 // pred_check
      %p375 = pneg %p374
    $region62: #{residual_block2d_forward.1} parent=5 // pred_check_branch
      %377 = sbr.rel (%p375) target = $region64
    $region63: #{residual_block2d_forward.1} parent=5 // pred_region
      // Predicated region
      $region65: #{residual_block2d_forward.1} parent=63 // pred_check
        %p378 = pneg %p39
      $region66: #{residual_block2d_forward.1} parent=63 // pred_check_branch
        %380 = sbr.rel (%p378) target = $region68
      $region67: #{residual_block2d_forward.1} parent=63 // pred_region
        %p381 = scmp.lt.s32.totalorder %s19, 1
        %s382 = scalar_select %p381, %s19, 1
        %s383 = smul.addr %s382, 4
        %s384 = smul.addr %s383, 2
        %s385 = scalar_lea.vmem %s0, %s384
      $region68: #{residual_block2d_forward.1} parent=63 // pred_fallthru
        _
    $region64: #{residual_block2d_forward.1} parent=5 // pred_fallthru
      _
    %p386 = scmp.le.s32.totalorder 1, %s19
    %p387 = scmp.lt.s32.totalorder %s19, 3
    %p388 = pnand %p386, %p387
    %p389 = pneg %p388
    // Predicated region
    $region69: #{residual_block2d_forward.1} parent=5 // pred_check
      _
    $region70: #{residual_block2d_forward.1} parent=5 // pred_check_branch
      %391 = sbr.rel (%p388) target = $region72
    $region71: #{residual_block2d_forward.1} parent=5 // pred_region
      %s392 = ssub.s32 %s19, 1
      %p393 = scmp.lt.s32.totalorder %s24, 1
      %s394 = scalar_select %p393, %s24, 1
      %s395 = smul.addr %s394, 4
      %s396 = smul.addr %s395, 2
      %s397 = scalar_lea.vmem %s0, %s396
      %p398 = pneg %p45
      %p399 = pneg %p42
      %p400 = pneg %p66
      %p401 = pneg %p63
      %p402 = pneg %p87
      %p403 = pneg %p84
      %p404 = pneg %p108
      %p405 = pneg %p105
      %p406 = pneg %p129
      %p407 = pneg %p126
      %p408 = pneg %p150
      %p409 = pneg %p147
      %p410 = pneg %p171
      %p411 = pneg %p168
      %p412 = pneg %p192
      %p413 = pneg %p189
      %p414 = pneg %p213
      %p415 = pneg %p210
      %p416 = pneg %p234
      %p417 = pneg %p231
      %p418 = pneg %p255
      %p419 = pneg %p252
      %p420 = pneg %p276
      %p421 = pneg %p273
      %p422 = pneg %p297
      %p423 = pneg %p294
      %p424 = pneg %p323
      %p425 = pneg %p320
      %p426 = scmp.lt.s32.totalorder %s24, 1
      %s427 = scalar_select %p426, %s24, 1
      %s428 = smul.addr %s427, 6
      %s429 = smul.addr %s428, 8
      %s430 = scalar_lea.vmem %s13, %s429
      %p431 = scmp.lt.s32.totalorder %s24, 1
      %s432 = scalar_select %p431, %s24, 1
      %s433 = smul.addr %s432, 4
      %s434 = smul.addr %s433, 2
      %s435 = scalar_lea.vmem %s0, %s434
      %p436 = scmp.lt.s32.totalorder %s24, 1
      %s437 = scalar_select %p436, %s24, 1
      %s438 = smul.addr %s437, 6
      %s439 = smul.addr %s438, 8
      %s440 = scalar_lea.vmem %s13, %s439
      %v442 = vld [vmem:[%s10] sm:$0x7]
      %443 = vst [vmem:[#allocation2] sm:$0xff] 0
      %444 = vst [vmem:[#allocation2 + $0x8] sm:$0xf] 0
      %445 = vst [vmem:[#allocation2 + $0xc] sm:$0xff] 0
      %446 = vst [vmem:[#allocation2 + $0x14] sm:$0xf] 0
      %447 = vst [vmem:[#allocation2 + $0x18] sm:$0xff] 0
      %448 = vst [vmem:[#allocation2 + $0x20] sm:$0xf] 0
      %449 = vst [vmem:[#allocation2 + $0x24] sm:$0xff] 0
      %450 = vst [vmem:[#allocation2 + $0x2c] sm:$0xf] 0
      %451 = vst [vmem:[#allocation2 + $0x30] sm:$0xff] 0
      %452 = vst [vmem:[#allocation2 + $0x38] sm:$0xf] 0
      %453 = vst [vmem:[#allocation2 + $0x3c] sm:$0xff] 0
      %454 = vst [vmem:[#allocation2 + $0x44] sm:$0xf] 0
      %455 = vst [vmem:[#allocation2 + $0x48] sm:$0xff] 0
      %456 = vst [vmem:[#allocation2 + $0x50] sm:$0xf] 0
      %457 = vst [vmem:[#allocation2 + $0x54] sm:$0xff] 0
      %458 = vst [vmem:[#allocation2 + $0x5c] sm:$0xf] 0
      %459 = vst [vmem:[#allocation2 + $0x60] sm:$0xff] 0
      %460 = vst [vmem:[#allocation2 + $0x68] sm:$0xf] 0
      %v461 = vld [vmem:[%s435] sm:$0x3f]
      %v463 = vcombine.high %v461, %v461
      %v465 = vunpack.c.l.s4 1983009808
      %v466 = vunpack.c.0.s8 %v465
      %v467 = vlaneseq
      %v468 = vshrl.u32 %v467, 7
      %v469 = vsub.s32 %v466, %v468
      %v470 = vrot.slane %v461, %v469
      %v472 = vunpack.c.l.s4 1983009808
      %v473 = vunpack.c.0.s8 %v472
      %v474 = vlaneseq
      %v475 = vshrl.u32 %v474, 7
      %v476 = vsub.s32 %v473, %v475
      %v477 = vrot.slane %v463, %v476
      %480 = vst [vmem:[#allocation2] sm:$0x33] %v470
      %481 = vst [vmem:[#allocation2 + $0x8] sm:$0x3] %v477
      %v482 = vld [vmem:[%s435] sm:$0xff]
      %v484 = vcombine.high %v482, %v482
      %v486 = vunpack.c.l.s4 1983009808
      %v487 = vunpack.c.0.s8 %v486
      %v488 = vlaneseq
      %v489 = vshrl.u32 %v488, 7
      %v490 = vsub.s32 %v487, %v489
      %v491 = vrot.slane %v482, %v490
      %v493 = vunpack.c.l.s4 1983009808
      %v494 = vunpack.c.0.s8 %v493
      %v495 = vlaneseq
      %v496 = vshrl.u32 %v495, 7
      %v497 = vsub.s32 %v494, %v496
      %v498 = vrot.slane %v484, %v497
      %499 = vrot.lane.b32.xlu0 %v491, 127
      %v500 = vpop.permute.xlu0 %499
      %501 = vrot.lane.b32.xlu0 %v498, 127
      %v502 = vpop.permute.xlu0 %501
      %v503 = vrot.slane %v500, 4
      %v504 = vrot.slane %v502, 4
      %vm505 = vcmask 1043456
      %v506 = vsel %vm505, %v503, %v504
      %vm507 = vcmask 1039360
      %v508 = vsel %vm507, %v500, %v506
      %v509 = vsel %vm507, %v502, %v504
      %512 = vst [vmem:[#allocation2 + $0xc] sm:$0x33] %v508
      %513 = vst [vmem:[#allocation2 + $0x14] sm:$0x3] %v509
      %v514 = vld [vmem:[%s435] sm:$0xff]
      %v516 = vcombine.high %v514, %v514
      %v518 = vunpack.c.l.s4 1983009808
      %v519 = vunpack.c.0.s8 %v518
      %v520 = vlaneseq
      %v521 = vshrl.u32 %v520, 7
      %v522 = vsub.s32 %v519, %v521
      %v523 = vrot.slane %v514, %v522
      %v525 = vunpack.c.l.s4 1983009808
      %v526 = vunpack.c.0.s8 %v525
      %v527 = vlaneseq
      %v528 = vshrl.u32 %v527, 7
      %v529 = vsub.s32 %v526, %v528
      %v530 = vrot.slane %v516, %v529
      %531 = vrot.lane.b32.xlu0 %v523, 126
      %v532 = vpop.permute.xlu0 %531
      %533 = vrot.lane.b32.xlu0 %v530, 126
      %v534 = vpop.permute.xlu0 %533
      %v535 = vrot.slane %v532, 4
      %v536 = vrot.slane %v534, 4
      %v537 = vsel %vm505, %v535, %v536
      %vm538 = vcmask 1031168
      %v539 = vsel %vm538, %v532, %v537
      %v540 = vsel %vm538, %v534, %v536
      %543 = vst [vmem:[#allocation2 + $0x18] sm:$0x33] %v539
      %544 = vst [vmem:[#allocation2 + $0x20] sm:$0x3] %v540
      %v545 = vld [vmem:[%s435] sm:$0xff]
      %v547 = vcombine.high %v545, %v545
      %v549 = vunpack.c.l.s4 1983009808
      %v550 = vunpack.c.0.s8 %v549
      %v551 = vlaneseq
      %v552 = vshrl.u32 %v551, 7
      %v553 = vsub.s32 %v550, %v552
      %v554 = vrot.slane %v545, %v553
      %v556 = vunpack.c.l.s4 1983009808
      %v557 = vunpack.c.0.s8 %v556
      %v558 = vlaneseq
      %v559 = vshrl.u32 %v558, 7
      %v560 = vsub.s32 %v557, %v559
      %v561 = vrot.slane %v547, %v560
      %562 = vrot.lane.b32.xlu0 %v554, 110
      %v563 = vpop.permute.xlu0 %562
      %564 = vrot.lane.b32.xlu0 %v561, 110
      %v565 = vpop.permute.xlu0 %564
      %v566 = vrot.slane %v563, 4
      %v567 = vrot.slane %v565, 4
      %v568 = vsel %vm505, %v566, %v567
      %vm569 = vcmask 900096
      %v570 = vsel %vm569, %v563, %v568
      %v571 = vsel %vm569, %v565, %v567
      %574 = vst [vmem:[#allocation2 + $0x24] sm:$0x33] %v570
      %575 = vst [vmem:[#allocation2 + $0x2c] sm:$0x3] %v571
      %v576 = vld [vmem:[%s435] sm:$0xff]
      %v578 = vcombine.high %v576, %v576
      %v580 = vunpack.c.l.s4 1983009808
      %v581 = vunpack.c.0.s8 %v580
      %v582 = vlaneseq
      %v583 = vshrl.u32 %v582, 7
      %v584 = vsub.s32 %v581, %v583
      %v585 = vrot.slane %v576, %v584
      %v587 = vunpack.c.l.s4 1983009808
      %v588 = vunpack.c.0.s8 %v587
      %v589 = vlaneseq
      %v590 = vshrl.u32 %v589, 7
      %v591 = vsub.s32 %v588, %v590
      %v592 = vrot.slane %v578, %v591
      %593 = vrot.lane.b32.xlu0 %v585, 109
      %v594 = vpop.permute.xlu0 %593
      %595 = vrot.lane.b32.xlu0 %v592, 109
      %v596 = vpop.permute.xlu0 %595
      %v597 = vrot.slane %v594, 4
      %v598 = vrot.slane %v596, 4
      %v599 = vsel %vm505, %v597, %v598
      %vm600 = vcmask 891904
      %v601 = vsel %vm600, %v594, %v599
      %v602 = vsel %vm600, %v596, %v598
      %605 = vst [vmem:[#allocation2 + $0x30] sm:$0x33] %v601
      %606 = vst [vmem:[#allocation2 + $0x38] sm:$0x3] %v602
      %v607 = vld [vmem:[%s435] sm:$0xff]
      %v609 = vcombine.high %v607, %v607
      %v611 = vunpack.c.l.s4 1983009808
      %v612 = vunpack.c.0.s8 %v611
      %v613 = vlaneseq
      %v614 = vshrl.u32 %v613, 7
      %v615 = vsub.s32 %v612, %v614
      %v616 = vrot.slane %v607, %v615
      %v618 = vunpack.c.l.s4 1983009808
      %v619 = vunpack.c.0.s8 %v618
      %v620 = vlaneseq
      %v621 = vshrl.u32 %v620, 7
      %v622 = vsub.s32 %v619, %v621
      %v623 = vrot.slane %v609, %v622
      %624 = vrot.lane.b32.xlu0 %v616, 108
      %v625 = vpop.permute.xlu0 %624
      %626 = vrot.lane.b32.xlu0 %v623, 108
      %v627 = vpop.permute.xlu0 %626
      %v628 = vrot.slane %v625, 4
      %v629 = vrot.slane %v627, 4
      %v630 = vsel %vm505, %v628, %v629
      %vm631 = vcmask 883712
      %v632 = vsel %vm631, %v625, %v630
      %v633 = vsel %vm631, %v627, %v629
      %636 = vst [vmem:[#allocation2 + $0x3c] sm:$0x33] %v632
      %637 = vst [vmem:[#allocation2 + $0x44] sm:$0x3] %v633
      %v638 = vld [vmem:[%s435] sm:$0xff]
      %v640 = vcombine.high %v638, %v638
      %v642 = vunpack.c.l.s4 1983009808
      %v643 = vunpack.c.0.s8 %v642
      %v644 = vlaneseq
      %v645 = vshrl.u32 %v644, 7
      %v646 = vsub.s32 %v643, %v645
      %v647 = vrot.slane %v638, %v646
      %v649 = vunpack.c.l.s4 1983009808
      %v650 = vunpack.c.0.s8 %v649
      %v651 = vlaneseq
      %v652 = vshrl.u32 %v651, 7
      %v653 = vsub.s32 %v650, %v652
      %v654 = vrot.slane %v640, %v653
      %655 = vrot.lane.b32.xlu0 %v647, 92
      %v656 = vpop.permute.xlu0 %655
      %657 = vrot.lane.b32.xlu0 %v654, 92
      %v658 = vpop.permute.xlu0 %657
      %v659 = vrot.slane %v656, 4
      %v660 = vrot.slane %v658, 4
      %v661 = vsel %vm505, %v659, %v660
      %vm662 = vcmask 752640
      %v663 = vsel %vm662, %v656, %v661
      %v664 = vsel %vm662, %v658, %v660
      %667 = vst [vmem:[#allocation2 + $0x48] sm:$0x33] %v663
      %668 = vst [vmem:[#allocation2 + $0x50] sm:$0x3] %v664
      %v669 = vld [vmem:[%s435] sm:$0xff]
      %v671 = vcombine.high %v669, %v669
      %v673 = vunpack.c.l.s4 1983009808
      %v674 = vunpack.c.0.s8 %v673
      %v675 = vlaneseq
      %v676 = vshrl.u32 %v675, 7
      %v677 = vsub.s32 %v674, %v676
      %v678 = vrot.slane %v669, %v677
      %v680 = vunpack.c.l.s4 1983009808
      %v681 = vunpack.c.0.s8 %v680
      %v682 = vlaneseq
      %v683 = vshrl.u32 %v682, 7
      %v684 = vsub.s32 %v681, %v683
      %v685 = vrot.slane %v671, %v684
      %686 = vrot.lane.b32.xlu0 %v678, 91
      %v687 = vpop.permute.xlu0 %686
      %688 = vrot.lane.b32.xlu0 %v685, 91
      %v689 = vpop.permute.xlu0 %688
      %v690 = vrot.slane %v687, 4
      %v691 = vrot.slane %v689, 4
      %v692 = vsel %vm505, %v690, %v691
      %vm693 = vcmask 744448
      %v694 = vsel %vm693, %v687, %v692
      %v695 = vsel %vm693, %v689, %v691
      %698 = vst [vmem:[#allocation2 + $0x54] sm:$0x33] %v694
      %699 = vst [vmem:[#allocation2 + $0x5c] sm:$0x3] %v695
      %v700 = vld [vmem:[%s435] sm:$0xff]
      %v702 = vcombine.high %v700, %v700
      %v704 = vunpack.c.l.s4 1983009808
      %v705 = vunpack.c.0.s8 %v704
      %v706 = vlaneseq
      %v707 = vshrl.u32 %v706, 7
      %v708 = vsub.s32 %v705, %v707
      %v709 = vrot.slane %v700, %v708
      %v711 = vunpack.c.l.s4 1983009808
      %v712 = vunpack.c.0.s8 %v711
      %v713 = vlaneseq
      %v714 = vshrl.u32 %v713, 7
      %v715 = vsub.s32 %v712, %v714
      %v716 = vrot.slane %v702, %v715
      %717 = vrot.lane.b32.xlu0 %v709, 90
      %v718 = vpop.permute.xlu0 %717
      %719 = vrot.lane.b32.xlu0 %v716, 90
      %v720 = vpop.permute.xlu0 %719
      %v721 = vrot.slane %v718, 4
      %v722 = vrot.slane %v720, 4
      %v723 = vsel %vm505, %v721, %v722
      %vm724 = vcmask 736256
      %v725 = vsel %vm724, %v718, %v723
      %v726 = vsel %vm724, %v720, %v722
      %729 = vst [vmem:[#allocation2 + $0x60] sm:$0x33] %v725
      %730 = vst [vmem:[#allocation2 + $0x68] sm:$0x3] %v726
      %v731 = vld [vmem:[%s1] sm:$0xf]
      %v732 = vld [vmem:[%s1 + $0x4] sm:$0xf]
      %v733 = vld [vmem:[#allocation2] sm:$0xff]
      %v734 = vld [vmem:[#allocation2 + $0x8] sm:$0xf]
      %v735 = vld [vmem:[#allocation2 + $0xc] sm:$0xff]
      %v736 = vld [vmem:[#allocation2 + $0x14] sm:$0xf]
      %v737 = vld [vmem:[#allocation2 + $0x18] sm:$0xff]
      %v738 = vld [vmem:[#allocation2 + $0x20] sm:$0xf]
      %v739 = vld [vmem:[#allocation2 + $0x24] sm:$0xff]
      %v740 = vld [vmem:[#allocation2 + $0x2c] sm:$0xf]
      %v741 = vld [vmem:[#allocation2 + $0x30] sm:$0xff]
      %v742 = vld [vmem:[#allocation2 + $0x38] sm:$0xf]
      %v743 = vld [vmem:[#allocation2 + $0x3c] sm:$0xff]
      %v744 = vld [vmem:[#allocation2 + $0x44] sm:$0xf]
      %v745 = vld [vmem:[#allocation2 + $0x48] sm:$0xff]
      %v746 = vld [vmem:[#allocation2 + $0x50] sm:$0xf]
      %v747 = vld [vmem:[#allocation2 + $0x54] sm:$0xff]
      %v748 = vld [vmem:[#allocation2 + $0x5c] sm:$0xf]
      %v749 = vld [vmem:[#allocation2 + $0x60] sm:$0xff]
      %v750 = vld [vmem:[#allocation2 + $0x68] sm:$0xf]
      %v751 = vld [vmem:[%s2] sm:$0xff]
      %v752 = vld [vmem:[%s2 + $0x8] sm:$0xff]
      %754 = vset.pattern.permute.xlu0 0
      %755 = vperm.xlu0 %754, %v751
      %v756 = vpop.permute.xlu0 %755
      %759 = vset.pattern.permute.xlu0 0
      %760 = vperm.xlu0 %759, %v752
      %v761 = vpop.permute.xlu0 %760
      %v765 = vunpack.c.l.b16 %v731
      %v766 = vunpack.c.l.b16 %v732
      %v767 = vpack.c.b16 %v766, %v765
      %v786 = vunpack.c.l.b16 %v733
      %v787 = vunpack.c.h.b16 %v733
      %v788 = vunpack.c.l.b16 %v734
      %v789 = vunpack.c.l.b16 %v735
      %v790 = vunpack.c.h.b16 %v735
      %v791 = vunpack.c.l.b16 %v736
      %v792 = vunpack.c.l.b16 %v737
      %v793 = vunpack.c.h.b16 %v737
      %v794 = vunpack.c.l.b16 %v738
      %v795 = vunpack.c.l.b16 %v739
      %v796 = vunpack.c.h.b16 %v739
      %v797 = vunpack.c.l.b16 %v740
      %v798 = vunpack.c.l.b16 %v741
      %v799 = vunpack.c.h.b16 %v741
      %v800 = vunpack.c.l.b16 %v742
      %v801 = vunpack.c.l.b16 %v743
      %v802 = vunpack.c.h.b16 %v743
      %v803 = vunpack.c.l.b16 %v744
      %v804 = vunpack.c.l.b16 %v745
      %v805 = vunpack.c.h.b16 %v745
      %v806 = vunpack.c.l.b16 %v746
      %v807 = vunpack.c.l.b16 %v747
      %v808 = vunpack.c.h.b16 %v747
      %v809 = vunpack.c.l.b16 %v748
      %v810 = vunpack.c.l.b16 %v749
      %v811 = vunpack.c.h.b16 %v749
      %v812 = vunpack.c.l.b16 %v750
      %v813 = vpack.c.b16 %v789, %v786
      %v814 = vpack.c.b16 %v790, %v787
      %v815 = vpack.c.b16 %v791, %v788
      %v816 = vpack.c.b16 %v795, %v792
      %v817 = vpack.c.b16 %v796, %v793
      %v818 = vpack.c.b16 %v797, %v794
      %v819 = vpack.c.b16 %v801, %v798
      %v820 = vpack.c.b16 %v802, %v799
      %v821 = vpack.c.b16 %v803, %v800
      %v822 = vpack.c.b16 %v807, %v804
      %v823 = vpack.c.b16 %v808, %v805
      %v824 = vpack.c.b16 %v809, %v806
      %v825 = vpack.c.b16 %v810, %v810
      %v826 = vpack.c.b16 %v811, %v811
      %v827 = vpack.c.b16 %v812, %v812
      %vm840 = vcmask 588800
      %v842 = vsel %vm840, %v767, 0
      %vm844 = vcmask 1043456
      %v846 = vsel %vm844, %v825, 0
      %v849 = vsel %vm844, %v826, 0
      %v852 = vsel %vm844, %v827, 0
      %854 = vmatprep.subr.bf16.mxu0 %v814
      %855 = vmatpush1.bf16.msra.mxu0 %v813
      %856 = vmatprep.subr.bf16.mxu0 %v817
      %857 = vmatpush1.bf16.msra.mxu0 %v816
      %858 = vmatprep.subr.bf16.mxu0 %v820
      %859 = vmatpush1.bf16.msra.mxu0 %v819
      %860 = vmatprep.subr.bf16.mxu0 %v823
      %861 = vmatpush1.bf16.msra.mxu0 %v822
      %862 = vmatprep.subr.bf16.mxu0 %v849
      %863 = vmatpush1.bf16.msra.mxu0 %v846
      %864 = vmatprep.subr.bf16.mxu0 0
      %865 = vmatpush1.bf16.msra.mxu0 0
      %866 = vmatprep.subr.bf16.mxu0 0
      %867 = vmatpush1.bf16.msra.mxu0 0
      %868 = vmatprep.subr.bf16.mxu0 0
      %869 = vmatpush1.bf16.msra.mxu0 0
      %870 = vmatprep.subr.bf16.mxu0 0
      %871 = vmatpush1.bf16.msra.mxu0 0
      %872 = vmatprep.subr.bf16.mxu0 0
      %873 = vmatpush1.bf16.msra.mxu0 0
      %874 = vmatprep.subr.bf16.mxu0 0
      %875 = vmatpush1.bf16.msra.mxu0 0
      %876 = vmatprep.subr.bf16.mxu0 0
      %877 = vmatpush1.bf16.msra.mxu0 0
      %878 = vmatprep.subr.bf16.mxu0 0
      %879 = vmatpush1.bf16.msra.mxu0 0
      %880 = vmatprep.subr.bf16.mxu0 0
      %881 = vmatpush1.bf16.msra.mxu0 0
      %882 = vmatprep.subr.bf16.mxu0 0
      %883 = vmatpush1.bf16.msra.mxu0 0
      %884 = vmatprep.subr.bf16.mxu0 0
      %885 = vmatpush1.bf16.msra.mxu0 0
      %886 = vmatprep.mubr.bf16.mxu0 0
      %887 = vmatmul.mubr.bf16.gmra.mrb[0].mxu0 %v842
      %v888 = vpop.f32.mrb[0].mxu0
      %v889 = vadd.f32 %v756, %v888
      %v890 = vpop.f32.mrb[0].mxu0
      %v891 = vadd.f32 %v756, %v890
      %v892 = vpop.f32.mrb[0].mxu0
      %v893 = vadd.f32 %v761, %v892
      %v894 = vpop.f32.mrb[0].mxu0
      %v895 = vadd.f32 %v761, %v894
      %896 = vdwg.mxu0
      %897 = vmatprep.subr.bf16.mxu0 0
      %898 = vmatpush1.bf16.msra.mxu0 %v815
      %899 = vmatprep.subr.bf16.mxu0 0
      %900 = vmatpush1.bf16.msra.mxu0 %v818
      %901 = vmatprep.subr.bf16.mxu0 0
      %902 = vmatpush1.bf16.msra.mxu0 %v821
      %903 = vmatprep.subr.bf16.mxu0 0
      %904 = vmatpush1.bf16.msra.mxu0 %v824
      %905 = vmatprep.subr.bf16.mxu0 0
      %906 = vmatpush1.bf16.msra.mxu0 %v852
      %907 = vmatprep.subr.bf16.mxu0 0
      %908 = vmatpush1.bf16.msra.mxu0 0
      %909 = vmatprep.subr.bf16.mxu0 0
      %910 = vmatpush1.bf16.msra.mxu0 0
      %911 = vmatprep.subr.bf16.mxu0 0
      %912 = vmatpush1.bf16.msra.mxu0 0
      %913 = vmatprep.subr.bf16.mxu0 0
      %914 = vmatpush1.bf16.msra.mxu0 0
      %915 = vmatprep.subr.bf16.mxu0 0
      %916 = vmatpush1.bf16.msra.mxu0 0
      %917 = vmatprep.subr.bf16.mxu0 0
      %918 = vmatpush1.bf16.msra.mxu0 0
      %919 = vmatprep.subr.bf16.mxu0 0
      %920 = vmatpush1.bf16.msra.mxu0 0
      %921 = vmatprep.subr.bf16.mxu0 0
      %922 = vmatpush1.bf16.msra.mxu0 0
      %923 = vmatprep.subr.bf16.mxu0 0
      %924 = vmatpush1.bf16.msra.mxu0 0
      %925 = vmatprep.subr.bf16.mxu0 0
      %926 = vmatpush1.bf16.msra.mxu0 0
      %927 = vmatprep.subr.bf16.mxu0 0
      %928 = vmatpush1.bf16.msra.mxu0 0
      %929 = vmatprep.mubr.bf16.mxu0 0
      %930 = vmatmul.mubr.bf16.gmra.mrb[0].mxu0 %v842
      %v931 = vpop.f32.mrb[0].mxu0
      %v932 = vadd.f32 %v756, %v931
      %v933 = vpop.f32.mrb[0].mxu0
      %v934 = vpop.f32.mrb[0].mxu0
      %v935 = vadd.f32 %v761, %v934
      %v936 = vpop.f32.mrb[0].mxu0
      %937 = vdwg.mxu0
      %v938 = vld [vmem:[%s3] sm:$0xff]
      %v939 = vld [vmem:[%s3 + $0x8] sm:$0xff]
      %v940 = vld [vmem:[%s4] sm:$0xff]
      %v941 = vld [vmem:[%s4 + $0x8] sm:$0xff]
      %v942 = vld [vmem:[%s9] sm:$0xff]
      %v943 = vld [vmem:[%s9 + $0x8] sm:$0xff]
      %v945 = vlaneseq
      %v946 = vshrl.u32 %v945, 7
      %v947 = vsub.s32 0, %v946
      %v948 = vrot.slane %v442, %v947
      %v949 = vlaneseq
      %v950 = vshrl.u32 %v949, 7
      %v951 = vsub.s32 1, %v950
      %v952 = vrot.slane %v442, %v951
      %v953 = vlaneseq
      %v954 = vshrl.u32 %v953, 7
      %v955 = vsub.s32 2, %v954
      %v956 = vrot.slane %v442, %v955
      %v960 = vmul.f32 %v889, %v948
      %v961 = vmul.f32 %v891, %v952
      %v962 = vmul.f32 %v932, %v956
      %v963 = vmul.f32 %v893, %v948
      %v964 = vmul.f32 %v895, %v952
      %v965 = vmul.f32 %v935, %v956
      %v966 = vadd.f32 %v960, %v961
      %v967 = vadd.f32 %v966, %v962
      %968 = vadd.xlane.f32.xlu0 %v967
      %v969 = vpop.xlane.xlu0 %968
      %v970 = vadd.f32 %v963, %v964
      %v971 = vadd.f32 %v970, %v965
      %972 = vadd.xlane.f32.xlu0 %v971
      %v973 = vpop.xlane.xlu0 %972
      %vm974 = vcmask 130048
      %v976 = vsel %vm974, %v942, 0
      %v979 = vsel %vm974, %v943, 0
      %981 = vmatprep.subr.mxu0 0.0
      %982 = vmatpush1.msra.mxu0 %v969
      %983 = vmatprep.subr.mxu0 0.0
      %984 = vmatpush1.msra.mxu0 %v973
      %985 = vmatprep.subr.mxu0 0.0
      %986 = vmatpush1.msra.mxu0 0.0
      %987 = vmatprep.subr.mxu0 0.0
      %988 = vmatpush1.msra.mxu0 0.0
      %989 = vmatprep.subr.mxu0 0.0
      %990 = vmatpush1.msra.mxu0 0.0
      %991 = vmatprep.subr.mxu0 0.0
      %992 = vmatpush1.msra.mxu0 0.0
      %993 = vmatprep.subr.mxu0 0.0
      %994 = vmatpush1.msra.mxu0 0.0
      %995 = vmatprep.subr.mxu0 0.0
      %996 = vmatpush1.msra.mxu0 0.0
      %997 = vmatprep.subr.mxu0 0.0
      %998 = vmatpush1.msra.mxu0 0.0
      %999 = vmatprep.subr.mxu0 0.0
      %1000 = vmatpush1.msra.mxu0 0.0
      %1001 = vmatprep.subr.mxu0 0.0
      %1002 = vmatpush1.msra.mxu0 0.0
      %1003 = vmatprep.subr.mxu0 0.0
      %1004 = vmatpush1.msra.mxu0 0.0
      %1005 = vmatprep.subr.mxu0 0.0
      %1006 = vmatpush1.msra.mxu0 0.0
      %1007 = vmatprep.subr.mxu0 0.0
      %1008 = vmatpush1.msra.mxu0 0.0
      %1009 = vmatprep.subr.mxu0 0.0
      %1010 = vmatpush1.msra.mxu0 0.0
      %1011 = vmatprep.subr.mxu0 0.0
      %1012 = vmatpush1.msra.mxu0 0.0
      %1013 = vmatprep.subr.mxu0 0.0
      %1014 = vmatpush1.msra.mxu0 0.0
      %1015 = vmatprep.subr.mxu0 0.0
      %1016 = vmatpush1.msra.mxu0 0.0
      %1017 = vmatprep.subr.mxu0 0.0
      %1018 = vmatpush1.msra.mxu0 0.0
      %1019 = vmatprep.subr.mxu0 0.0
      %1020 = vmatpush1.msra.mxu0 0.0
      %1021 = vmatprep.subr.mxu0 0.0
      %1022 = vmatpush1.msra.mxu0 0.0
      %1023 = vmatprep.subr.mxu0 0.0
      %1024 = vmatpush1.msra.mxu0 0.0
      %1025 = vmatprep.subr.mxu0 0.0
      %1026 = vmatpush1.msra.mxu0 0.0
      %1027 = vmatprep.subr.mxu0 0.0
      %1028 = vmatpush1.msra.mxu0 0.0
      %1029 = vmatprep.subr.mxu0 0.0
      %1030 = vmatpush1.msra.mxu0 0.0
      %1031 = vmatprep.subr.mxu0 0.0
      %1032 = vmatpush1.msra.mxu0 0.0
      %1033 = vmatprep.subr.mxu0 0.0
      %1034 = vmatpush1.msra.mxu0 0.0
      %1035 = vmatprep.subr.mxu0 0.0
      %1036 = vmatpush1.msra.mxu0 0.0
      %1037 = vmatprep.subr.mxu0 0.0
      %1038 = vmatpush1.msra.mxu0 0.0
      %1039 = vmatprep.subr.mxu0 0.0
      %1040 = vmatpush1.msra.mxu0 0.0
      %1041 = vmatprep.subr.mxu0 0.0
      %1042 = vmatpush1.msra.mxu0 0.0
      %1043 = vmatprep.subr.mxu0 0.0
      %1044 = vmatpush1.msra.mxu0 0.0
      %1045 = vmatprep.mubr.f32.mxu0 0.0
      %1046 = vmatmul.mubr.f32.gmra.mrb[0].mxu0 %v976
      %v1047 = vpop.f32.mrb[0].mxu0
      %v1048 = vadd.f32 0.0, %v1047
      %v1049 = vpop.f32.mrb[0].mxu0
      %1050 = vmatprep.mubr.f32.mxu0 0.0
      %1051 = vmatmul.mubr.f32.gmra.mrb[0].mxu0 %v979
      %v1052 = vpop.f32.mrb[0].mxu0
      %v1053 = vadd.f32 0.0, %v1052
      %v1054 = vpop.f32.mrb[0].mxu0
      %1055 = vdwg.mxu0
      %1057 = vset.pattern.permute.xlu0 0
      %1058 = vperm.xlu0 %1057, %v1048
      %v1059 = vpop.permute.xlu0 %1058
      %1062 = vset.pattern.permute.xlu0 0
      %1063 = vperm.xlu0 %1062, %v1053
      %v1064 = vpop.permute.xlu0 %1063
      %v1066 = vsub.f32 %v889, %v1059
      %v1067 = vsub.f32 %v891, %v1059
      %v1068 = vsub.f32 %v932, %v1059
      %v1069 = vsub.f32 %v893, %v1064
      %v1070 = vsub.f32 %v895, %v1064
      %v1071 = vsub.f32 %v935, %v1064
      %v1072 = vmul.f32 %v1066, %v1066
      %v1073 = vmul.f32 %v1067, %v1067
      %v1074 = vmul.f32 %v1068, %v1068
      %v1075 = vmul.f32 %v1069, %v1069
      %v1076 = vmul.f32 %v1070, %v1070
      %v1077 = vmul.f32 %v1071, %v1071
      %v1078 = vmul.f32 %v1072, %v948
      %v1079 = vmul.f32 %v1073, %v952
      %v1080 = vmul.f32 %v1074, %v956
      %v1081 = vmul.f32 %v1075, %v948
      %v1082 = vmul.f32 %v1076, %v952
      %v1083 = vmul.f32 %v1077, %v956
      %v1084 = vadd.f32 %v1078, %v1079
      %v1085 = vadd.f32 %v1084, %v1080
      %1086 = vadd.xlane.f32.xlu0 %v1085
      %v1087 = vpop.xlane.xlu0 %1086
      %v1088 = vadd.f32 %v1081, %v1082
      %v1089 = vadd.f32 %v1088, %v1083
      %1090 = vadd.xlane.f32.xlu0 %v1089
      %v1091 = vpop.xlane.xlu0 %1090
      %1092 = vmatprep.subr.mxu0 0.0
      %1093 = vmatpush1.msra.mxu0 %v1087
      %1094 = vmatprep.subr.mxu0 0.0
      %1095 = vmatpush1.msra.mxu0 %v1091
      %1096 = vmatprep.subr.mxu0 0.0
      %1097 = vmatpush1.msra.mxu0 0.0
      %1098 = vmatprep.subr.mxu0 0.0
      %1099 = vmatpush1.msra.mxu0 0.0
      %1100 = vmatprep.subr.mxu0 0.0
      %1101 = vmatpush1.msra.mxu0 0.0
      %1102 = vmatprep.subr.mxu0 0.0
      %1103 = vmatpush1.msra.mxu0 0.0
      %1104 = vmatprep.subr.mxu0 0.0
      %1105 = vmatpush1.msra.mxu0 0.0
      %1106 = vmatprep.subr.mxu0 0.0
      %1107 = vmatpush1.msra.mxu0 0.0
      %1108 = vmatprep.subr.mxu0 0.0
      %1109 = vmatpush1.msra.mxu0 0.0
      %1110 = vmatprep.subr.mxu0 0.0
      %1111 = vmatpush1.msra.mxu0 0.0
      %1112 = vmatprep.subr.mxu0 0.0
      %1113 = vmatpush1.msra.mxu0 0.0
      %1114 = vmatprep.subr.mxu0 0.0
      %1115 = vmatpush1.msra.mxu0 0.0
      %1116 = vmatprep.subr.mxu0 0.0
      %1117 = vmatpush1.msra.mxu0 0.0
      %1118 = vmatprep.subr.mxu0 0.0
      %1119 = vmatpush1.msra.mxu0 0.0
      %1120 = vmatprep.subr.mxu0 0.0
      %1121 = vmatpush1.msra.mxu0 0.0
      %1122 = vmatprep.subr.mxu0 0.0
      %1123 = vmatpush1.msra.mxu0 0.0
      %1124 = vmatprep.subr.mxu0 0.0
      %1125 = vmatpush1.msra.mxu0 0.0
      %1126 = vmatprep.subr.mxu0 0.0
      %1127 = vmatpush1.msra.mxu0 0.0
      %1128 = vmatprep.subr.mxu0 0.0
      %1129 = vmatpush1.msra.mxu0 0.0
      %1130 = vmatprep.subr.mxu0 0.0
      %1131 = vmatpush1.msra.mxu0 0.0
      %1132 = vmatprep.subr.mxu0 0.0
      %1133 = vmatpush1.msra.mxu0 0.0
      %1134 = vmatprep.subr.mxu0 0.0
      %1135 = vmatpush1.msra.mxu0 0.0
      %1136 = vmatprep.subr.mxu0 0.0
      %1137 = vmatpush1.msra.mxu0 0.0
      %1138 = vmatprep.subr.mxu0 0.0
      %1139 = vmatpush1.msra.mxu0 0.0
      %1140 = vmatprep.subr.mxu0 0.0
      %1141 = vmatpush1.msra.mxu0 0.0
      %1142 = vmatprep.subr.mxu0 0.0
      %1143 = vmatpush1.msra.mxu0 0.0
      %1144 = vmatprep.subr.mxu0 0.0
      %1145 = vmatpush1.msra.mxu0 0.0
      %1146 = vmatprep.subr.mxu0 0.0
      %1147 = vmatpush1.msra.mxu0 0.0
      %1148 = vmatprep.subr.mxu0 0.0
      %1149 = vmatpush1.msra.mxu0 0.0
      %1150 = vmatprep.subr.mxu0 0.0
      %1151 = vmatpush1.msra.mxu0 0.0
      %1152 = vmatprep.subr.mxu0 0.0
      %1153 = vmatpush1.msra.mxu0 0.0
      %1154 = vmatprep.subr.mxu0 0.0
      %1155 = vmatpush1.msra.mxu0 0.0
      %1156 = vmatprep.mubr.f32.mxu0 0.0
      %1157 = vmatmul.mubr.f32.gmra.mrb[0].mxu0 %v976
      %v1158 = vpop.f32.mrb[0].mxu0
      %v1159 = vadd.f32 1e-05, %v1158
      %v1160 = vpop.f32.mrb[0].mxu0
      %1161 = vmatprep.mubr.f32.mxu0 0.0
      %1162 = vmatmul.mubr.f32.gmra.mrb[0].mxu0 %v979
      %v1163 = vpop.f32.mrb[0].mxu0
      %v1164 = vadd.f32 1e-05, %v1163
      %v1165 = vpop.f32.mrb[0].mxu0
      %1166 = vdwg.mxu0
      %v1167 = vrsqrt.pop %v1159
      %v1168 = vrsqrt.pop %v1164
      %1170 = vset.pattern.permute.xlu0 0
      %1171 = vperm.xlu0 %1170, %v1167
      %v1172 = vpop.permute.xlu0 %1171
      %1175 = vset.pattern.permute.xlu0 0
      %1176 = vperm.xlu0 %1175, %v1168
      %v1177 = vpop.permute.xlu0 %1176
      %v1179 = vmul.f32 %v1066, %v1172
      %v1180 = vmul.f32 %v1067, %v1172
      %v1181 = vmul.f32 %v1068, %v1172
      %v1182 = vmul.f32 %v1069, %v1177
      %v1183 = vmul.f32 %v1070, %v1177
      %v1184 = vmul.f32 %v1071, %v1177
      %1186 = vset.pattern.permute.xlu0 0
      %1187 = vperm.xlu0 %1186, %v938
      %v1188 = vpop.permute.xlu0 %1187
      %1191 = vset.pattern.permute.xlu0 0
      %1192 = vperm.xlu0 %1191, %v939
      %v1193 = vpop.permute.xlu0 %1192
      %v1195 = vmul.f32 %v1179, %v1188
      %v1196 = vmul.f32 %v1180, %v1188
      %v1197 = vmul.f32 %v1181, %v1188
      %v1198 = vmul.f32 %v1182, %v1193
      %v1199 = vmul.f32 %v1183, %v1193
      %v1200 = vmul.f32 %v1184, %v1193
      %1202 = vset.pattern.permute.xlu0 0
      %1203 = vperm.xlu0 %1202, %v940
      %v1204 = vpop.permute.xlu0 %1203
      %1207 = vset.pattern.permute.xlu0 0
      %1208 = vperm.xlu0 %1207, %v941
      %v1209 = vpop.permute.xlu0 %1208
      %v1211 = vadd.f32 %v1195, %v1204
      %v1212 = vadd.f32 %v1196, %v1204
      %v1213 = vadd.f32 %v1197, %v1204
      %v1214 = vadd.f32 %v1198, %v1209
      %v1215 = vadd.f32 %v1199, %v1209
      %v1216 = vadd.f32 %v1200, %v1209
      %v1217 = vmin.f32 %v1211, 20.0
      %v1218 = vmin.f32 %v1212, 20.0
      %v1219 = vmin.f32 %v1213, 20.0
      %v1220 = vmin.f32 %v1214, 20.0
      %v1221 = vmin.f32 %v1215, 20.0
      %v1222 = vmin.f32 %v1216, 20.0
      %v1223 = vmul.f32 %v1217, 1.442695
      %v1224 = vpow.pop %v1223
      %v1225 = vmul.f32 %v1218, 1.442695
      %v1226 = vpow.pop %v1225
      %v1227 = vmul.f32 %v1219, 1.442695
      %v1228 = vpow.pop %v1227
      %v1229 = vmul.f32 %v1220, 1.442695
      %v1230 = vpow.pop %v1229
      %v1231 = vmul.f32 %v1221, 1.442695
      %v1232 = vpow.pop %v1231
      %v1233 = vmul.f32 %v1222, 1.442695
      %v1234 = vpow.pop %v1233
      %v1235 = vadd.f32 %v1224, 2.0
      %v1236 = vadd.f32 %v1226, 2.0
      %v1237 = vadd.f32 %v1228, 2.0
      %v1238 = vadd.f32 %v1230, 2.0
      %v1239 = vadd.f32 %v1232, 2.0
      %v1240 = vadd.f32 %v1234, 2.0
      %v1241 = vmul.f32 %v1224, %v1235
      %v1242 = vmul.f32 %v1226, %v1236
      %v1243 = vmul.f32 %v1228, %v1237
      %v1244 = vmul.f32 %v1230, %v1238
      %v1245 = vmul.f32 %v1232, %v1239
      %v1246 = vmul.f32 %v1234, %v1240
      %v1247 = vadd.f32 %v1241, 2.0
      %v1248 = vadd.f32 %v1242, 2.0
      %v1249 = vadd.f32 %v1243, 2.0
      %v1250 = vadd.f32 %v1244, 2.0
      %v1251 = vadd.f32 %v1245, 2.0
      %v1252 = vadd.f32 %v1246, 2.0
      %v1253 = vrcp.pop %v1247
      %v1254 = vrcp.pop %v1248
      %v1255 = vrcp.pop %v1249
      %v1256 = vrcp.pop %v1250
      %v1257 = vrcp.pop %v1251
      %v1258 = vrcp.pop %v1252
      %v1259 = vmul.f32 %v1241, %v1253
      %v1260 = vmul.f32 %v1242, %v1254
      %v1261 = vmul.f32 %v1243, %v1255
      %v1262 = vmul.f32 %v1244, %v1256
      %v1263 = vmul.f32 %v1245, %v1257
      %v1264 = vmul.f32 %v1246, %v1258
      %vm1265 = vcmp.gt.f32.partialorder %v1211, 20.0
      %vm1266 = vcmp.gt.f32.partialorder %v1212, 20.0
      %vm1267 = vcmp.gt.f32.partialorder %v1213, 20.0
      %vm1268 = vcmp.gt.f32.partialorder %v1214, 20.0
      %vm1269 = vcmp.gt.f32.partialorder %v1215, 20.0
      %vm1270 = vcmp.gt.f32.partialorder %v1216, 20.0
      %v1271 = vsel %vm1265, 1.0, %v1259
      %v1272 = vsel %vm1266, 1.0, %v1260
      %v1273 = vsel %vm1267, 1.0, %v1261
      %v1274 = vsel %vm1268, 1.0, %v1262
      %v1275 = vsel %vm1269, 1.0, %v1263
      %v1276 = vsel %vm1270, 1.0, %v1264
      %v1277 = vmul.f32 %v1211, %v1271
      %v1278 = vmul.f32 %v1212, %v1272
      %v1279 = vmul.f32 %v1213, %v1273
      %v1280 = vmul.f32 %v1214, %v1274
      %v1281 = vmul.f32 %v1215, %v1275
      %v1282 = vmul.f32 %v1216, %v1276
      %v1283 = vmul.f32 %v1277, %v948
      %v1284 = vmul.f32 %v1278, %v952
      %v1285 = vmul.f32 %v1279, %v956
      %v1286 = vmul.f32 %v1280, %v948
      %v1287 = vmul.f32 %v1281, %v952
      %v1288 = vmul.f32 %v1282, %v956
      %1289 = vst [vmem:[#allocation3] sm:$0xff] 0
      %1290 = vst [vmem:[#allocation3 + $0x8] sm:$0xff] 0
      %1291 = vst [vmem:[#allocation3 + $0x10] sm:$0xff] 0
      %1292 = vst [vmem:[#allocation3 + $0x18] sm:$0xff] 0
      %1293 = vst [vmem:[#allocation3 + $0x20] sm:$0xff] 0
      %v1294 = vpack.c.bf16 %v1286, %v1283
      %v1295 = vpack.c.bf16 %v1287, %v1284
      %v1296 = vpack.c.bf16 %v1288, %v1285
      %1297 = vst [vmem:[#allocation3 + $0x8] sm:$0xff] %v1294
      %1298 = vst [vmem:[#allocation3 + $0x10] sm:$0xff] %v1295
      %vm1299 = vcmask 261120
      %1300 = vst.msk [vmem:[#allocation3 + $0x18] sm:$0xff] %vm1299, %v1296
      %v1301 = vld [vmem:[#allocation3] sm:$0xff]
      %v1302 = vld [vmem:[#allocation3 + $0x8] sm:$0xff]
      %v1303 = vld [vmem:[#allocation3 + $0x10] sm:$0xff]
      %v1304 = vld [vmem:[#allocation3 + $0x18] sm:$0xff]
      %1309 = vrot.lane.b32.xlu0 %v1301, 19
      %v1310 = vpop.permute.xlu0 %1309
      %1311 = vrot.lane.b32.xlu0 %v1302, 19
      %v1312 = vpop.permute.xlu0 %1311
      %1313 = vrot.lane.b32.xlu0 %v1303, 19
      %v1314 = vpop.permute.xlu0 %1313
      %1315 = vrot.lane.b32.xlu0 %v1304, 19
      %v1316 = vpop.permute.xlu0 %1315
      %vm1317 = vcmask 154624
      %v1318 = vsel %vm1317, %v1310, %v1312
      %v1319 = vsel %vm1317, %v1312, %v1314
      %v1320 = vsel %vm1317, %v1314, %v1316
      %1324 = vst [vmem:[#allocation4] sm:$0xff] %v1318
      %1325 = vst [vmem:[#allocation4 + $0x8] sm:$0xff] %v1319
      %1326 = vst [vmem:[#allocation4 + $0x10] sm:$0xff] %v1320
      %v1327 = vld [vmem:[#allocation3] sm:$0xff]
      %v1328 = vld [vmem:[#allocation3 + $0x8] sm:$0xff]
      %v1329 = vld [vmem:[#allocation3 + $0x10] sm:$0xff]
      %v1330 = vld [vmem:[#allocation3 + $0x18] sm:$0xff]
      %1335 = vrot.lane.b32.xlu0 %v1327, 18
      %v1336 = vpop.permute.xlu0 %1335
      %1337 = vrot.lane.b32.xlu0 %v1328, 18
      %v1338 = vpop.permute.xlu0 %1337
      %1339 = vrot.lane.b32.xlu0 %v1329, 18
      %v1340 = vpop.permute.xlu0 %1339
      %1341 = vrot.lane.b32.xlu0 %v1330, 18
      %v1342 = vpop.permute.xlu0 %1341
      %vm1343 = vcmask 146432
      %v1344 = vsel %vm1343, %v1336, %v1338
      %v1345 = vsel %vm1343, %v1338, %v1340
      %v1346 = vsel %vm1343, %v1340, %v1342
      %1350 = vst [vmem:[#allocation4 + $0x18] sm:$0xff] %v1344
      %1351 = vst [vmem:[#allocation4 + $0x20] sm:$0xff] %v1345
      %1352 = vst [vmem:[#allocation4 + $0x28] sm:$0xff] %v1346
      %v1353 = vld [vmem:[#allocation3] sm:$0xff]
      %v1354 = vld [vmem:[#allocation3 + $0x8] sm:$0xff]
      %v1355 = vld [vmem:[#allocation3 + $0x10] sm:$0xff]
      %v1356 = vld [vmem:[#allocation3 + $0x18] sm:$0xff]
      %1361 = vrot.lane.b32.xlu0 %v1353, 17
      %v1362 = vpop.permute.xlu0 %1361
      %1363 = vrot.lane.b32.xlu0 %v1354, 17
      %v1364 = vpop.permute.xlu0 %1363
      %1365 = vrot.lane.b32.xlu0 %v1355, 17
      %v1366 = vpop.permute.xlu0 %1365
      %1367 = vrot.lane.b32.xlu0 %v1356, 17
      %v1368 = vpop.permute.xlu0 %1367
      %vm1369 = vcmask 138240
      %v1370 = vsel %vm1369, %v1362, %v1364
      %v1371 = vsel %vm1369, %v1364, %v1366
      %v1372 = vsel %vm1369, %v1366, %v1368
      %1376 = vst [vmem:[#allocation4 + $0x30] sm:$0xff] %v1370
      %1377 = vst [vmem:[#allocation4 + $0x38] sm:$0xff] %v1371
      %1378 = vst [vmem:[#allocation4 + $0x40] sm:$0xff] %v1372
      %v1379 = vld [vmem:[#allocation3] sm:$0xff]
      %v1380 = vld [vmem:[#allocation3 + $0x8] sm:$0xff]
      %v1381 = vld [vmem:[#allocation3 + $0x10] sm:$0xff]
      %v1382 = vld [vmem:[#allocation3 + $0x18] sm:$0xff]
      %1387 = vrot.lane.b32.xlu0 %v1379, 1
      %v1388 = vpop.permute.xlu0 %1387
      %1389 = vrot.lane.b32.xlu0 %v1380, 1
      %v1390 = vpop.permute.xlu0 %1389
      %1391 = vrot.lane.b32.xlu0 %v1381, 1
      %v1392 = vpop.permute.xlu0 %1391
      %1393 = vrot.lane.b32.xlu0 %v1382, 1
      %v1394 = vpop.permute.xlu0 %1393
      %vm1395 = vcmask 7168
      %v1396 = vsel %vm1395, %v1388, %v1390
      %v1397 = vsel %vm1395, %v1390, %v1392
      %v1398 = vsel %vm1395, %v1392, %v1394
      %1402 = vst [vmem:[#allocation4 + $0x48] sm:$0xff] %v1396
      %1403 = vst [vmem:[#allocation4 + $0x50] sm:$0xff] %v1397
      %1404 = vst [vmem:[#allocation4 + $0x58] sm:$0xff] %v1398
      %v1405 = vld [vmem:[#allocation3 + $0x8] sm:$0xff]
      %v1406 = vld [vmem:[#allocation3 + $0x10] sm:$0xff]
      %v1407 = vld [vmem:[#allocation3 + $0x18] sm:$0xff]
      %1408 = vst [vmem:[#allocation4 + $0x60] sm:$0xff] %v1405
      %1409 = vst [vmem:[#allocation4 + $0x68] sm:$0xff] %v1406
      %1410 = vst [vmem:[#allocation4 + $0x70] sm:$0xff] %v1407
      %v1411 = vld [vmem:[#allocation3 + $0x8] sm:$0xff]
      %v1412 = vld [vmem:[#allocation3 + $0x10] sm:$0xff]
      %v1413 = vld [vmem:[#allocation3 + $0x18] sm:$0xff]
      %v1414 = vld [vmem:[#allocation3 + $0x20] sm:$0xff]
      %1419 = vrot.lane.b32.xlu0 %v1411, 127
      %v1420 = vpop.permute.xlu0 %1419
      %1421 = vrot.lane.b32.xlu0 %v1412, 127
      %v1422 = vpop.permute.xlu0 %1421
      %1423 = vrot.lane.b32.xlu0 %v1413, 127
      %v1424 = vpop.permute.xlu0 %1423
      %1425 = vrot.lane.b32.xlu0 %v1414, 127
      %v1426 = vpop.permute.xlu0 %1425
      %v1427 = vsel %vm507, %v1420, %v1422
      %v1428 = vsel %vm507, %v1422, %v1424
      %v1429 = vsel %vm507, %v1424, %v1426
      %1433 = vst [vmem:[#allocation4 + $0x78] sm:$0xff] %v1427
      %1434 = vst [vmem:[#allocation4 + $0x80] sm:$0xff] %v1428
      %1435 = vst [vmem:[#allocation4 + $0x88] sm:$0xff] %v1429
      %v1436 = vld [vmem:[#allocation3 + $0x8] sm:$0xff]
      %v1437 = vld [vmem:[#allocation3 + $0x10] sm:$0xff]
      %v1438 = vld [vmem:[#allocation3 + $0x18] sm:$0xff]
      %v1439 = vld [vmem:[#allocation3 + $0x20] sm:$0xff]
      %1444 = vrot.lane.b32.xlu0 %v1436, 111
      %v1445 = vpop.permute.xlu0 %1444
      %1446 = vrot.lane.b32.xlu0 %v1437, 111
      %v1447 = vpop.permute.xlu0 %1446
      %1448 = vrot.lane.b32.xlu0 %v1438, 111
      %v1449 = vpop.permute.xlu0 %1448
      %1450 = vrot.lane.b32.xlu0 %v1439, 111
      %v1451 = vpop.permute.xlu0 %1450
      %vm1452 = vcmask 908288
      %v1453 = vsel %vm1452, %v1445, %v1447
      %v1454 = vsel %vm1452, %v1447, %v1449
      %v1455 = vsel %vm1452, %v1449, %v1451
      %1459 = vst [vmem:[#allocation4 + $0x90] sm:$0xff] %v1453
      %1460 = vst [vmem:[#allocation4 + $0x98] sm:$0xff] %v1454
      %1461 = vst [vmem:[#allocation4 + $0xa0] sm:$0xff] %v1455
      %v1462 = vld [vmem:[#allocation3 + $0x8] sm:$0xff]
      %v1463 = vld [vmem:[#allocation3 + $0x10] sm:$0xff]
      %v1464 = vld [vmem:[#allocation3 + $0x18] sm:$0xff]
      %v1465 = vld [vmem:[#allocation3 + $0x20] sm:$0xff]
      %1470 = vrot.lane.b32.xlu0 %v1462, 110
      %v1471 = vpop.permute.xlu0 %1470
      %1472 = vrot.lane.b32.xlu0 %v1463, 110
      %v1473 = vpop.permute.xlu0 %1472
      %1474 = vrot.lane.b32.xlu0 %v1464, 110
      %v1475 = vpop.permute.xlu0 %1474
      %1476 = vrot.lane.b32.xlu0 %v1465, 110
      %v1477 = vpop.permute.xlu0 %1476
      %v1478 = vsel %vm569, %v1471, %v1473
      %v1479 = vsel %vm569, %v1473, %v1475
      %v1480 = vsel %vm569, %v1475, %v1477
      %1484 = vst [vmem:[#allocation4 + $0xa8] sm:$0xff] %v1478
      %1485 = vst [vmem:[#allocation4 + $0xb0] sm:$0xff] %v1479
      %1486 = vst [vmem:[#allocation4 + $0xb8] sm:$0xff] %v1480
      %v1487 = vld [vmem:[#allocation3 + $0x8] sm:$0xff]
      %v1488 = vld [vmem:[#allocation3 + $0x10] sm:$0xff]
      %v1489 = vld [vmem:[#allocation3 + $0x18] sm:$0xff]
      %v1490 = vld [vmem:[#allocation3 + $0x20] sm:$0xff]
      %1495 = vrot.lane.b32.xlu0 %v1487, 109
      %v1496 = vpop.permute.xlu0 %1495
      %1497 = vrot.lane.b32.xlu0 %v1488, 109
      %v1498 = vpop.permute.xlu0 %1497
      %1499 = vrot.lane.b32.xlu0 %v1489, 109
      %v1500 = vpop.permute.xlu0 %1499
      %1501 = vrot.lane.b32.xlu0 %v1490, 109
      %v1502 = vpop.permute.xlu0 %1501
      %v1503 = vsel %vm600, %v1496, %v1498
      %v1504 = vsel %vm600, %v1498, %v1500
      %v1505 = vsel %vm600, %v1500, %v1502
      %1509 = vst [vmem:[#allocation4 + $0xc0] sm:$0xff] %v1503
      %1510 = vst [vmem:[#allocation4 + $0xc8] sm:$0xff] %v1504
      %1511 = vst [vmem:[#allocation4 + $0xd0] sm:$0xff] %v1505
      %v1512 = vld [vmem:[%s5] sm:$0xff]
      %v1513 = vld [vmem:[%s5 + $0x8] sm:$0xff]
      %v1514 = vld [vmem:[#allocation4] sm:$0xff]
      %v1515 = vld [vmem:[#allocation4 + $0x8] sm:$0xff]
      %v1516 = vld [vmem:[#allocation4 + $0x10] sm:$0xff]
      %v1517 = vld [vmem:[#allocation4 + $0x18] sm:$0xff]
      %v1518 = vld [vmem:[#allocation4 + $0x20] sm:$0xff]
      %v1519 = vld [vmem:[#allocation4 + $0x28] sm:$0xff]
      %v1520 = vld [vmem:[#allocation4 + $0x30] sm:$0xff]
      %v1521 = vld [vmem:[#allocation4 + $0x38] sm:$0xff]
      %v1522 = vld [vmem:[#allocation4 + $0x40] sm:$0xff]
      %v1523 = vld [vmem:[#allocation4 + $0x48] sm:$0xff]
      %v1524 = vld [vmem:[#allocation4 + $0x50] sm:$0xff]
      %v1525 = vld [vmem:[#allocation4 + $0x58] sm:$0xff]
      %v1526 = vld [vmem:[#allocation4 + $0x60] sm:$0xff]
      %v1527 = vld [vmem:[#allocation4 + $0x68] sm:$0xff]
      %v1528 = vld [vmem:[#allocation4 + $0x70] sm:$0xff]
      %v1529 = vld [vmem:[#allocation4 + $0x78] sm:$0xff]
      %v1530 = vld [vmem:[#allocation4 + $0x80] sm:$0xff]
      %v1531 = vld [vmem:[#allocation4 + $0x88] sm:$0xff]
      %v1532 = vld [vmem:[#allocation4 + $0x90] sm:$0xff]
      %v1533 = vld [vmem:[#allocation4 + $0x98] sm:$0xff]
      %v1534 = vld [vmem:[#allocation4 + $0xa0] sm:$0xff]
      %v1535 = vld [vmem:[#allocation4 + $0xa8] sm:$0xff]
      %v1536 = vld [vmem:[#allocation4 + $0xb0] sm:$0xff]
      %v1537 = vld [vmem:[#allocation4 + $0xb8] sm:$0xff]
      %v1538 = vld [vmem:[#allocation4 + $0xc0] sm:$0xff]
      %v1539 = vld [vmem:[#allocation4 + $0xc8] sm:$0xff]
      %v1540 = vld [vmem:[#allocation4 + $0xd0] sm:$0xff]
      %v1541 = vld [vmem:[%s6] sm:$0xff]
      %v1542 = vld [vmem:[%s6 + $0x8] sm:$0xff]
      %1544 = vset.pattern.permute.xlu0 0
      %1545 = vperm.xlu0 %1544, %v1541
      %v1546 = vpop.permute.xlu0 %1545
      %1549 = vset.pattern.permute.xlu0 0
      %1550 = vperm.xlu0 %1549, %v1542
      %v1551 = vpop.permute.xlu0 %1550
      %v1555 = vunpack.c.l.b16 %v1512
      %v1556 = vunpack.c.h.b16 %v1512
      %v1557 = vunpack.c.l.b16 %v1513
      %v1558 = vunpack.c.h.b16 %v1513
      %v1559 = vpack.c.b16 %v1557, %v1555
      %v1560 = vpack.c.b16 %v1558, %v1556
      %v1563 = vsel %vm974, %v1560, 0
      %1565 = vmatprep.subr.bf16.mxu0 %v1515
      %1566 = vmatpush1.bf16.msra.mxu0 %v1514
      %1567 = vmatprep.subr.bf16.mxu0 %v1518
      %1568 = vmatpush1.bf16.msra.mxu0 %v1517
      %1569 = vmatprep.subr.bf16.mxu0 %v1521
      %1570 = vmatpush1.bf16.msra.mxu0 %v1520
      %1571 = vmatprep.subr.bf16.mxu0 %v1524
      %1572 = vmatpush1.bf16.msra.mxu0 %v1523
      %1573 = vmatprep.subr.bf16.mxu0 %v1527
      %1574 = vmatpush1.bf16.msra.mxu0 %v1526
      %1575 = vmatprep.subr.bf16.mxu0 %v1530
      %1576 = vmatpush1.bf16.msra.mxu0 %v1529
      %1577 = vmatprep.subr.bf16.mxu0 %v1533
      %1578 = vmatpush1.bf16.msra.mxu0 %v1532
      %1579 = vmatprep.subr.bf16.mxu0 %v1536
      %1580 = vmatpush1.bf16.msra.mxu0 %v1535
      %1581 = vmatprep.subr.bf16.mxu0 %v1539
      %1582 = vmatpush1.bf16.msra.mxu0 %v1538
      %1583 = vmatprep.subr.bf16.mxu0 0
      %1584 = vmatpush1.bf16.msra.mxu0 0
      %1585 = vmatprep.subr.bf16.mxu0 0
      %1586 = vmatpush1.bf16.msra.mxu0 0
      %1587 = vmatprep.subr.bf16.mxu0 0
      %1588 = vmatpush1.bf16.msra.mxu0 0
      %1589 = vmatprep.subr.bf16.mxu0 0
      %1590 = vmatpush1.bf16.msra.mxu0 0
      %1591 = vmatprep.subr.bf16.mxu0 0
      %1592 = vmatpush1.bf16.msra.mxu0 0
      %1593 = vmatprep.subr.bf16.mxu0 0
      %1594 = vmatpush1.bf16.msra.mxu0 0
      %1595 = vmatprep.subr.bf16.mxu0 0
      %1596 = vmatpush1.bf16.msra.mxu0 0
      %1597 = vmatprep.mubr.bf16.mxu0 %v1563
      %1598 = vmatmul.mubr.bf16.gmra.mrb[0].mxu0 %v1559
      %v1599 = vpop.f32.mrb[0].mxu0
      %v1600 = vadd.f32 %v1546, %v1599
      %v1601 = vpop.f32.mrb[0].mxu0
      %v1602 = vadd.f32 %v1546, %v1601
      %v1603 = vpop.f32.mrb[0].mxu0
      %v1604 = vadd.f32 %v1551, %v1603
      %v1605 = vpop.f32.mrb[0].mxu0
      %v1606 = vadd.f32 %v1551, %v1605
      %1607 = vdwg.mxu0
      %1608 = vmatprep.subr.bf16.mxu0 0
      %1609 = vmatpush1.bf16.msra.mxu0 %v1516
      %1610 = vmatprep.subr.bf16.mxu0 0
      %1611 = vmatpush1.bf16.msra.mxu0 %v1519
      %1612 = vmatprep.subr.bf16.mxu0 0
      %1613 = vmatpush1.bf16.msra.mxu0 %v1522
      %1614 = vmatprep.subr.bf16.mxu0 0
      %1615 = vmatpush1.bf16.msra.mxu0 %v1525
      %1616 = vmatprep.subr.bf16.mxu0 0
      %1617 = vmatpush1.bf16.msra.mxu0 %v1528
      %1618 = vmatprep.subr.bf16.mxu0 0
      %1619 = vmatpush1.bf16.msra.mxu0 %v1531
      %1620 = vmatprep.subr.bf16.mxu0 0
      %1621 = vmatpush1.bf16.msra.mxu0 %v1534
      %1622 = vmatprep.subr.bf16.mxu0 0
      %1623 = vmatpush1.bf16.msra.mxu0 %v1537
      %1624 = vmatprep.subr.bf16.mxu0 0
      %1625 = vmatpush1.bf16.msra.mxu0 %v1540
      %1626 = vmatprep.subr.bf16.mxu0 0
      %1627 = vmatpush1.bf16.msra.mxu0 0
      %1628 = vmatprep.subr.bf16.mxu0 0
      %1629 = vmatpush1.bf16.msra.mxu0 0
      %1630 = vmatprep.subr.bf16.mxu0 0
      %1631 = vmatpush1.bf16.msra.mxu0 0
      %1632 = vmatprep.subr.bf16.mxu0 0
      %1633 = vmatpush1.bf16.msra.mxu0 0
      %1634 = vmatprep.subr.bf16.mxu0 0
      %1635 = vmatpush1.bf16.msra.mxu0 0
      %1636 = vmatprep.subr.bf16.mxu0 0
      %1637 = vmatpush1.bf16.msra.mxu0 0
      %1638 = vmatprep.subr.bf16.mxu0 0
      %1639 = vmatpush1.bf16.msra.mxu0 0
      %1640 = vmatprep.mubr.bf16.mxu0 %v1563
      %1641 = vmatmul.mubr.bf16.gmra.mrb[0].mxu0 %v1559
      %v1642 = vpop.f32.mrb[0].mxu0
      %v1643 = vadd.f32 %v1546, %v1642
      %v1644 = vpop.f32.mrb[0].mxu0
      %v1645 = vpop.f32.mrb[0].mxu0
      %v1646 = vadd.f32 %v1551, %v1645
      %v1647 = vpop.f32.mrb[0].mxu0
      %1648 = vdwg.mxu0
      %v1649 = vld [vmem:[%s7] sm:$0xff]
      %v1650 = vld [vmem:[%s7 + $0x8] sm:$0xff]
      %v1651 = vld [vmem:[%s8] sm:$0xff]
      %v1652 = vld [vmem:[%s8 + $0x8] sm:$0xff]
      %v1653 = vld [vmem:[%s9] sm:$0xff]
      %v1654 = vld [vmem:[%s9 + $0x8] sm:$0xff]
      %v1655 = vmul.f32 %v1600, %v948
      %v1656 = vmul.f32 %v1602, %v952
      %v1657 = vmul.f32 %v1643, %v956
      %v1658 = vmul.f32 %v1604, %v948
      %v1659 = vmul.f32 %v1606, %v952
      %v1660 = vmul.f32 %v1646, %v956
      %v1661 = vadd.f32 %v1655, %v1656
      %v1662 = vadd.f32 %v1661, %v1657
      %1663 = vadd.xlane.f32.xlu0 %v1662
      %v1664 = vpop.xlane.xlu0 %1663
      %v1665 = vadd.f32 %v1658, %v1659
      %v1666 = vadd.f32 %v1665, %v1660
      %1667 = vadd.xlane.f32.xlu0 %v1666
      %v1668 = vpop.xlane.xlu0 %1667
      %v1670 = vsel %vm974, %v1653, 0
      %v1673 = vsel %vm974, %v1654, 0
      %1675 = vmatprep.subr.mxu0 0.0
      %1676 = vmatpush1.msra.mxu0 %v1664
      %1677 = vmatprep.subr.mxu0 0.0
      %1678 = vmatpush1.msra.mxu0 %v1668
      %1679 = vmatprep.subr.mxu0 0.0
      %1680 = vmatpush1.msra.mxu0 0.0
      %1681 = vmatprep.subr.mxu0 0.0
      %1682 = vmatpush1.msra.mxu0 0.0
      %1683 = vmatprep.subr.mxu0 0.0
      %1684 = vmatpush1.msra.mxu0 0.0
      %1685 = vmatprep.subr.mxu0 0.0
      %1686 = vmatpush1.msra.mxu0 0.0
      %1687 = vmatprep.subr.mxu0 0.0
      %1688 = vmatpush1.msra.mxu0 0.0
      %1689 = vmatprep.subr.mxu0 0.0
      %1690 = vmatpush1.msra.mxu0 0.0
      %1691 = vmatprep.subr.mxu0 0.0
      %1692 = vmatpush1.msra.mxu0 0.0
      %1693 = vmatprep.subr.mxu0 0.0
      %1694 = vmatpush1.msra.mxu0 0.0
      %1695 = vmatprep.subr.mxu0 0.0
      %1696 = vmatpush1.msra.mxu0 0.0
      %1697 = vmatprep.subr.mxu0 0.0
      %1698 = vmatpush1.msra.mxu0 0.0
      %1699 = vmatprep.subr.mxu0 0.0
      %1700 = vmatpush1.msra.mxu0 0.0
      %1701 = vmatprep.subr.mxu0 0.0
      %1702 = vmatpush1.msra.mxu0 0.0
      %1703 = vmatprep.subr.mxu0 0.0
      %1704 = vmatpush1.msra.mxu0 0.0
      %1705 = vmatprep.subr.mxu0 0.0
      %1706 = vmatpush1.msra.mxu0 0.0
      %1707 = vmatprep.subr.mxu0 0.0
      %1708 = vmatpush1.msra.mxu0 0.0
      %1709 = vmatprep.subr.mxu0 0.0
      %1710 = vmatpush1.msra.mxu0 0.0
      %1711 = vmatprep.subr.mxu0 0.0
      %1712 = vmatpush1.msra.mxu0 0.0
      %1713 = vmatprep.subr.mxu0 0.0
      %1714 = vmatpush1.msra.mxu0 0.0
      %1715 = vmatprep.subr.mxu0 0.0
      %1716 = vmatpush1.msra.mxu0 0.0
      %1717 = vmatprep.subr.mxu0 0.0
      %1718 = vmatpush1.msra.mxu0 0.0
      %1719 = vmatprep.subr.mxu0 0.0
      %1720 = vmatpush1.msra.mxu0 0.0
      %1721 = vmatprep.subr.mxu0 0.0
      %1722 = vmatpush1.msra.mxu0 0.0
      %1723 = vmatprep.subr.mxu0 0.0
      %1724 = vmatpush1.msra.mxu0 0.0
      %1725 = vmatprep.subr.mxu0 0.0
      %1726 = vmatpush1.msra.mxu0 0.0
      %1727 = vmatprep.subr.mxu0 0.0
      %1728 = vmatpush1.msra.mxu0 0.0
      %1729 = vmatprep.subr.mxu0 0.0
      %1730 = vmatpush1.msra.mxu0 0.0
      %1731 = vmatprep.subr.mxu0 0.0
      %1732 = vmatpush1.msra.mxu0 0.0
      %1733 = vmatprep.subr.mxu0 0.0
      %1734 = vmatpush1.msra.mxu0 0.0
      %1735 = vmatprep.subr.mxu0 0.0
      %1736 = vmatpush1.msra.mxu0 0.0
      %1737 = vmatprep.subr.mxu0 0.0
      %1738 = vmatpush1.msra.mxu0 0.0
      %1739 = vmatprep.mubr.f32.mxu0 0.0
      %1740 = vmatmul.mubr.f32.gmra.mrb[0].mxu0 %v1670
      %v1741 = vpop.f32.mrb[0].mxu0
      %v1742 = vadd.f32 0.0, %v1741
      %v1743 = vpop.f32.mrb[0].mxu0
      %1744 = vmatprep.mubr.f32.mxu0 0.0
      %1745 = vmatmul.mubr.f32.gmra.mrb[0].mxu0 %v1673
      %v1746 = vpop.f32.mrb[0].mxu0
      %v1747 = vadd.f32 0.0, %v1746
      %v1748 = vpop.f32.mrb[0].mxu0
      %1749 = vdwg.mxu0
      %1751 = vset.pattern.permute.xlu0 0
      %1752 = vperm.xlu0 %1751, %v1742
      %v1753 = vpop.permute.xlu0 %1752
      %1756 = vset.pattern.permute.xlu0 0
      %1757 = vperm.xlu0 %1756, %v1747
      %v1758 = vpop.permute.xlu0 %1757
      %v1760 = vsub.f32 %v1600, %v1753
      %v1761 = vsub.f32 %v1602, %v1753
      %v1762 = vsub.f32 %v1643, %v1753
      %v1763 = vsub.f32 %v1604, %v1758
      %v1764 = vsub.f32 %v1606, %v1758
      %v1765 = vsub.f32 %v1646, %v1758
      %v1766 = vmul.f32 %v1760, %v1760
      %v1767 = vmul.f32 %v1761, %v1761
      %v1768 = vmul.f32 %v1762, %v1762
      %v1769 = vmul.f32 %v1763, %v1763
      %v1770 = vmul.f32 %v1764, %v1764
      %v1771 = vmul.f32 %v1765, %v1765
      %v1772 = vmul.f32 %v1766, %v948
      %v1773 = vmul.f32 %v1767, %v952
      %v1774 = vmul.f32 %v1768, %v956
      %v1775 = vmul.f32 %v1769, %v948
      %v1776 = vmul.f32 %v1770, %v952
      %v1777 = vmul.f32 %v1771, %v956
      %v1778 = vadd.f32 %v1772, %v1773
      %v1779 = vadd.f32 %v1778, %v1774
      %1780 = vadd.xlane.f32.xlu0 %v1779
      %v1781 = vpop.xlane.xlu0 %1780
      %v1782 = vadd.f32 %v1775, %v1776
      %v1783 = vadd.f32 %v1782, %v1777
      %1784 = vadd.xlane.f32.xlu0 %v1783
      %v1785 = vpop.xlane.xlu0 %1784
      %1786 = vmatprep.subr.mxu0 0.0
      %1787 = vmatpush1.msra.mxu0 %v1781
      %1788 = vmatprep.subr.mxu0 0.0
      %1789 = vmatpush1.msra.mxu0 %v1785
      %1790 = vmatprep.subr.mxu0 0.0
      %1791 = vmatpush1.msra.mxu0 0.0
      %1792 = vmatprep.subr.mxu0 0.0
      %1793 = vmatpush1.msra.mxu0 0.0
      %1794 = vmatprep.subr.mxu0 0.0
      %1795 = vmatpush1.msra.mxu0 0.0
      %1796 = vmatprep.subr.mxu0 0.0
      %1797 = vmatpush1.msra.mxu0 0.0
      %1798 = vmatprep.subr.mxu0 0.0
      %1799 = vmatpush1.msra.mxu0 0.0
      %1800 = vmatprep.subr.mxu0 0.0
      %1801 = vmatpush1.msra.mxu0 0.0
      %1802 = vmatprep.subr.mxu0 0.0
      %1803 = vmatpush1.msra.mxu0 0.0
      %1804 = vmatprep.subr.mxu0 0.0
      %1805 = vmatpush1.msra.mxu0 0.0
      %1806 = vmatprep.subr.mxu0 0.0
      %1807 = vmatpush1.msra.mxu0 0.0
      %1808 = vmatprep.subr.mxu0 0.0
      %1809 = vmatpush1.msra.mxu0 0.0
      %1810 = vmatprep.subr.mxu0 0.0
      %1811 = vmatpush1.msra.mxu0 0.0
      %1812 = vmatprep.subr.mxu0 0.0
      %1813 = vmatpush1.msra.mxu0 0.0
      %1814 = vmatprep.subr.mxu0 0.0
      %1815 = vmatpush1.msra.mxu0 0.0
      %1816 = vmatprep.subr.mxu0 0.0
      %1817 = vmatpush1.msra.mxu0 0.0
      %1818 = vmatprep.subr.mxu0 0.0
      %1819 = vmatpush1.msra.mxu0 0.0
      %1820 = vmatprep.subr.mxu0 0.0
      %1821 = vmatpush1.msra.mxu0 0.0
      %1822 = vmatprep.subr.mxu0 0.0
      %1823 = vmatpush1.msra.mxu0 0.0
      %1824 = vmatprep.subr.mxu0 0.0
      %1825 = vmatpush1.msra.mxu0 0.0
      %1826 = vmatprep.subr.mxu0 0.0
      %1827 = vmatpush1.msra.mxu0 0.0
      %1828 = vmatprep.subr.mxu0 0.0
      %1829 = vmatpush1.msra.mxu0 0.0
      %1830 = vmatprep.subr.mxu0 0.0
      %1831 = vmatpush1.msra.mxu0 0.0
      %1832 = vmatprep.subr.mxu0 0.0
      %1833 = vmatpush1.msra.mxu0 0.0
      %1834 = vmatprep.subr.mxu0 0.0
      %1835 = vmatpush1.msra.mxu0 0.0
      %1836 = vmatprep.subr.mxu0 0.0
      %1837 = vmatpush1.msra.mxu0 0.0
      %1838 = vmatprep.subr.mxu0 0.0
      %1839 = vmatpush1.msra.mxu0 0.0
      %1840 = vmatprep.subr.mxu0 0.0
      %1841 = vmatpush1.msra.mxu0 0.0
      %1842 = vmatprep.subr.mxu0 0.0
      %1843 = vmatpush1.msra.mxu0 0.0
      %1844 = vmatprep.subr.mxu0 0.0
      %1845 = vmatpush1.msra.mxu0 0.0
      %1846 = vmatprep.subr.mxu0 0.0
      %1847 = vmatpush1.msra.mxu0 0.0
      %1848 = vmatprep.subr.mxu0 0.0
      %1849 = vmatpush1.msra.mxu0 0.0
      %1850 = vmatprep.mubr.f32.mxu0 0.0
      %1851 = vmatmul.mubr.f32.gmra.mrb[0].mxu0 %v1670
      %v1852 = vpop.f32.mrb[0].mxu0
      %v1853 = vadd.f32 1e-05, %v1852
      %v1854 = vpop.f32.mrb[0].mxu0
      %1855 = vmatprep.mubr.f32.mxu0 0.0
      %1856 = vmatmul.mubr.f32.gmra.mrb[0].mxu0 %v1673
      %v1857 = vpop.f32.mrb[0].mxu0
      %v1858 = vadd.f32 1e-05, %v1857
      %v1859 = vpop.f32.mrb[0].mxu0
      %1860 = vdwg.mxu0
      %v1861 = vrsqrt.pop %v1853
      %v1862 = vrsqrt.pop %v1858
      %1864 = vset.pattern.permute.xlu0 0
      %1865 = vperm.xlu0 %1864, %v1861
      %v1866 = vpop.permute.xlu0 %1865
      %1869 = vset.pattern.permute.xlu0 0
      %1870 = vperm.xlu0 %1869, %v1862
      %v1871 = vpop.permute.xlu0 %1870
      %v1873 = vmul.f32 %v1760, %v1866
      %v1874 = vmul.f32 %v1761, %v1866
      %v1875 = vmul.f32 %v1762, %v1866
      %v1876 = vmul.f32 %v1763, %v1871
      %v1877 = vmul.f32 %v1764, %v1871
      %v1878 = vmul.f32 %v1765, %v1871
      %1880 = vset.pattern.permute.xlu0 0
      %1881 = vperm.xlu0 %1880, %v1649
      %v1882 = vpop.permute.xlu0 %1881
      %1885 = vset.pattern.permute.xlu0 0
      %1886 = vperm.xlu0 %1885, %v1650
      %v1887 = vpop.permute.xlu0 %1886
      %v1889 = vmul.f32 %v1873, %v1882
      %v1890 = vmul.f32 %v1874, %v1882
      %v1891 = vmul.f32 %v1875, %v1882
      %v1892 = vmul.f32 %v1876, %v1887
      %v1893 = vmul.f32 %v1877, %v1887
      %v1894 = vmul.f32 %v1878, %v1887
      %1896 = vset.pattern.permute.xlu0 0
      %1897 = vperm.xlu0 %1896, %v1651
      %v1898 = vpop.permute.xlu0 %1897
      %1901 = vset.pattern.permute.xlu0 0
      %1902 = vperm.xlu0 %1901, %v1652
      %v1903 = vpop.permute.xlu0 %1902
      %v1905 = vadd.f32 %v1889, %v1898
      %v1906 = vadd.f32 %v1890, %v1898
      %v1907 = vadd.f32 %v1891, %v1898
      %v1908 = vadd.f32 %v1892, %v1903
      %v1909 = vadd.f32 %v1893, %v1903
      %v1910 = vadd.f32 %v1894, %v1903
      %v1911 = vmin.f32 %v1905, 20.0
      %v1912 = vmin.f32 %v1906, 20.0
      %v1913 = vmin.f32 %v1907, 20.0
      %v1914 = vmin.f32 %v1908, 20.0
      %v1915 = vmin.f32 %v1909, 20.0
      %v1916 = vmin.f32 %v1910, 20.0
      %v1917 = vmul.f32 %v1911, 1.442695
      %v1918 = vpow.pop %v1917
      %v1919 = vmul.f32 %v1912, 1.442695
      %v1920 = vpow.pop %v1919
      %v1921 = vmul.f32 %v1913, 1.442695
      %v1922 = vpow.pop %v1921
      %v1923 = vmul.f32 %v1914, 1.442695
      %v1924 = vpow.pop %v1923
      %v1925 = vmul.f32 %v1915, 1.442695
      %v1926 = vpow.pop %v1925
      %v1927 = vmul.f32 %v1916, 1.442695
      %v1928 = vpow.pop %v1927
      %v1929 = vadd.f32 %v1918, 2.0
      %v1930 = vadd.f32 %v1920, 2.0
      %v1931 = vadd.f32 %v1922, 2.0
      %v1932 = vadd.f32 %v1924, 2.0
      %v1933 = vadd.f32 %v1926, 2.0
      %v1934 = vadd.f32 %v1928, 2.0
      %v1935 = vmul.f32 %v1918, %v1929
      %v1936 = vmul.f32 %v1920, %v1930
      %v1937 = vmul.f32 %v1922, %v1931
      %v1938 = vmul.f32 %v1924, %v1932
      %v1939 = vmul.f32 %v1926, %v1933
      %v1940 = vmul.f32 %v1928, %v1934
      %v1941 = vadd.f32 %v1935, 2.0
      %v1942 = vadd.f32 %v1936, 2.0
      %v1943 = vadd.f32 %v1937, 2.0
      %v1944 = vadd.f32 %v1938, 2.0
      %v1945 = vadd.f32 %v1939, 2.0
      %v1946 = vadd.f32 %v1940, 2.0
      %v1947 = vrcp.pop %v1941
      %v1948 = vrcp.pop %v1942
      %v1949 = vrcp.pop %v1943
      %v1950 = vrcp.pop %v1944
      %v1951 = vrcp.pop %v1945
      %v1952 = vrcp.pop %v1946
      %v1953 = vmul.f32 %v1935, %v1947
      %v1954 = vmul.f32 %v1936, %v1948
      %v1955 = vmul.f32 %v1937, %v1949
      %v1956 = vmul.f32 %v1938, %v1950
      %v1957 = vmul.f32 %v1939, %v1951
      %v1958 = vmul.f32 %v1940, %v1952
      %vm1959 = vcmp.gt.f32.partialorder %v1905, 20.0
      %vm1960 = vcmp.gt.f32.partialorder %v1906, 20.0
      %vm1961 = vcmp.gt.f32.partialorder %v1907, 20.0
      %vm1962 = vcmp.gt.f32.partialorder %v1908, 20.0
      %vm1963 = vcmp.gt.f32.partialorder %v1909, 20.0
      %vm1964 = vcmp.gt.f32.partialorder %v1910, 20.0
      %v1965 = vsel %vm1959, 1.0, %v1953
      %v1966 = vsel %vm1960, 1.0, %v1954
      %v1967 = vsel %vm1961, 1.0, %v1955
      %v1968 = vsel %vm1962, 1.0, %v1956
      %v1969 = vsel %vm1963, 1.0, %v1957
      %v1970 = vsel %vm1964, 1.0, %v1958
      %v1971 = vmul.f32 %v1905, %v1965
      %v1972 = vmul.f32 %v1906, %v1966
      %v1973 = vmul.f32 %v1907, %v1967
      %v1974 = vmul.f32 %v1908, %v1968
      %v1975 = vmul.f32 %v1909, %v1969
      %v1976 = vmul.f32 %v1910, %v1970
      %v1977 = vld [vmem:[%s435] sm:$0xff]
      %v1978 = vld [vmem:[%s11] sm:$0xf]
      %v1979 = vld [vmem:[%s11 + $0x4] sm:$0xf]
      %v1980 = vld [vmem:[%s12] sm:$0xff]
      %v1981 = vld [vmem:[%s12 + $0x8] sm:$0xff]
      %1983 = vset.pattern.permute.xlu0 0
      %1984 = vperm.xlu0 %1983, %v1980
      %v1985 = vpop.permute.xlu0 %1984
      %1988 = vset.pattern.permute.xlu0 0
      %1989 = vperm.xlu0 %1988, %v1981
      %v1990 = vpop.permute.xlu0 %1989
      %v1994 = vunpack.c.l.b16 %v1978
      %v1995 = vunpack.c.l.b16 %v1979
      %v1996 = vpack.c.b16 %v1995, %v1994
      %v1998 = vcombine.high %v1977, %v1977
      %v2000 = vunpack.c.l.s4 1983009808
      %v2001 = vunpack.c.0.s8 %v2000
      %v2002 = vlaneseq
      %v2003 = vshrl.u32 %v2002, 7
      %v2004 = vsub.s32 %v2001, %v2003
      %v2005 = vrot.slane %v1977, %v2004
      %v2007 = vunpack.c.l.s4 1983009808
      %v2008 = vunpack.c.0.s8 %v2007
      %v2009 = vlaneseq
      %v2010 = vshrl.u32 %v2009, 7
      %v2011 = vsub.s32 %v2008, %v2010
      %v2012 = vrot.slane %v1998, %v2011
      %v2013 = vcombine.high %v2005, %v2005
      %v2014 = vcombine.high %v2012, %v2012
      %2015 = vrot.lane.b32.xlu0 %v2005, 109
      %v2016 = vpop.permute.xlu0 %2015
      %2017 = vrot.lane.b32.xlu0 %v2013, 109
      %v2018 = vpop.permute.xlu0 %2017
      %2019 = vrot.lane.b32.xlu0 %v2012, 109
      %v2020 = vpop.permute.xlu0 %2019
      %2021 = vrot.lane.b32.xlu0 %v2014, 109
      %v2022 = vpop.permute.xlu0 %2021
      %v2023 = vsel %vm600, %v2016, %v2018
      %v2024 = vsel %vm600, %v2018, %v2020
      %v2025 = vsel %vm600, %v2020, %v2022
      %vm2026 = vcmask 31744
      %v2028 = vsel %vm2026, %v1996, 0
      %vm2030 = vcmask 1041408
      %v2032 = vsel %vm2030, %v2023, 0
      %v2035 = vsel %vm2030, %v2024, 0
      %v2038 = vsel %vm2030, %v2025, 0
      %2040 = vmatprep.subr.bf16.mxu0 %v2035
      %2041 = vmatpush1.bf16.msra.mxu0 %v2032
      %2042 = vmatprep.subr.bf16.mxu0 0
      %2043 = vmatpush1.bf16.msra.mxu0 0
      %2044 = vmatprep.subr.bf16.mxu0 0
      %2045 = vmatpush1.bf16.msra.mxu0 0
      %2046 = vmatprep.subr.bf16.mxu0 0
      %2047 = vmatpush1.bf16.msra.mxu0 0
      %2048 = vmatprep.subr.bf16.mxu0 0
      %2049 = vmatpush1.bf16.msra.mxu0 0
      %2050 = vmatprep.subr.bf16.mxu0 0
      %2051 = vmatpush1.bf16.msra.mxu0 0
      %2052 = vmatprep.subr.bf16.mxu0 0
      %2053 = vmatpush1.bf16.msra.mxu0 0
      %2054 = vmatprep.subr.bf16.mxu0 0
      %2055 = vmatpush1.bf16.msra.mxu0 0
      %2056 = vmatprep.subr.bf16.mxu0 0
      %2057 = vmatpush1.bf16.msra.mxu0 0
      %2058 = vmatprep.subr.bf16.mxu0 0
      %2059 = vmatpush1.bf16.msra.mxu0 0
      %2060 = vmatprep.subr.bf16.mxu0 0
      %2061 = vmatpush1.bf16.msra.mxu0 0
      %2062 = vmatprep.subr.bf16.mxu0 0
      %2063 = vmatpush1.bf16.msra.mxu0 0
      %2064 = vmatprep.subr.bf16.mxu0 0
      %2065 = vmatpush1.bf16.msra.mxu0 0
      %2066 = vmatprep.subr.bf16.mxu0 0
      %2067 = vmatpush1.bf16.msra.mxu0 0
      %2068 = vmatprep.subr.bf16.mxu0 0
      %2069 = vmatpush1.bf16.msra.mxu0 0
      %2070 = vmatprep.subr.bf16.mxu0 0
      %2071 = vmatpush1.bf16.msra.mxu0 0
      %2072 = vmatprep.mubr.bf16.mxu0 0
      %2073 = vmatmul.mubr.bf16.gmra.mrb[0].mxu0 %v2028
      %v2074 = vpop.f32.mrb[0].mxu0
      %v2075 = vadd.f32 %v1985, %v2074
      %v2076 = vpop.f32.mrb[0].mxu0
      %v2077 = vadd.f32 %v1985, %v2076
      %v2078 = vpop.f32.mrb[0].mxu0
      %v2079 = vadd.f32 %v1990, %v2078
      %v2080 = vpop.f32.mrb[0].mxu0
      %v2081 = vadd.f32 %v1990, %v2080
      %2082 = vdwg.mxu0
      %2083 = vmatprep.subr.bf16.mxu0 0
      %2084 = vmatpush1.bf16.msra.mxu0 %v2038
      %2085 = vmatprep.subr.bf16.mxu0 0
      %2086 = vmatpush1.bf16.msra.mxu0 0
      %2087 = vmatprep.subr.bf16.mxu0 0
      %2088 = vmatpush1.bf16.msra.mxu0 0
      %2089 = vmatprep.subr.bf16.mxu0 0
      %2090 = vmatpush1.bf16.msra.mxu0 0
      %2091 = vmatprep.subr.bf16.mxu0 0
      %2092 = vmatpush1.bf16.msra.mxu0 0
      %2093 = vmatprep.subr.bf16.mxu0 0
      %2094 = vmatpush1.bf16.msra.mxu0 0
      %2095 = vmatprep.subr.bf16.mxu0 0
      %2096 = vmatpush1.bf16.msra.mxu0 0
      %2097 = vmatprep.subr.bf16.mxu0 0
      %2098 = vmatpush1.bf16.msra.mxu0 0
      %2099 = vmatprep.subr.bf16.mxu0 0
      %2100 = vmatpush1.bf16.msra.mxu0 0
      %2101 = vmatprep.subr.bf16.mxu0 0
      %2102 = vmatpush1.bf16.msra.mxu0 0
      %2103 = vmatprep.subr.bf16.mxu0 0
      %2104 = vmatpush1.bf16.msra.mxu0 0
      %2105 = vmatprep.subr.bf16.mxu0 0
      %2106 = vmatpush1.bf16.msra.mxu0 0
      %2107 = vmatprep.subr.bf16.mxu0 0
      %2108 = vmatpush1.bf16.msra.mxu0 0
      %2109 = vmatprep.subr.bf16.mxu0 0
      %2110 = vmatpush1.bf16.msra.mxu0 0
      %2111 = vmatprep.subr.bf16.mxu0 0
      %2112 = vmatpush1.bf16.msra.mxu0 0
      %2113 = vmatprep.subr.bf16.mxu0 0
      %2114 = vmatpush1.bf16.msra.mxu0 0
      %2115 = vmatprep.mubr.bf16.mxu0 0
      %2116 = vmatmul.mubr.bf16.gmra.mrb[0].mxu0 %v2028
      %v2117 = vpop.f32.mrb[0].mxu0
      %v2118 = vadd.f32 %v1985, %v2117
      %v2119 = vpop.f32.mrb[0].mxu0
      %v2120 = vpop.f32.mrb[0].mxu0
      %v2121 = vadd.f32 %v1990, %v2120
      %v2122 = vpop.f32.mrb[0].mxu0
      %2123 = vdwg.mxu0
      %v2124 = vadd.f32 %v1971, %v2075
      %v2125 = vadd.f32 %v1972, %v2077
      %v2126 = vadd.f32 %v1973, %v2118
      %v2127 = vadd.f32 %v1974, %v2079
      %v2128 = vadd.f32 %v1975, %v2081
      %v2129 = vadd.f32 %v1976, %v2121
      %2130 = vst [vmem:[%s440] sm:$0xff] %v2124
      %2131 = vst [vmem:[%s440 + $0x8] sm:$0xff] %v2125
      %2132 = vst [vmem:[%s440 + $0x10] sm:$0xff] %v2126
      %2133 = vst [vmem:[%s440 + $0x18] sm:$0xff] %v2127
      %2134 = vst [vmem:[%s440 + $0x20] sm:$0xff] %v2128
      %2135 = vst [vmem:[%s440 + $0x28] sm:$0xff] %v2129
      %p2136 = scmp.lt.s32.totalorder %s24, 1
      %s2137 = scalar_select %p2136, %s24, 1
      %s2138 = smul.addr %s2137, 6
      %s2139 = smul.addr %s2138, 8
      %s2140 = scalar_lea.vmem %s13, %s2139
      // Predicated region
      $region73: #{residual_block2d_forward.1} parent=71 // pred_check
        %p2141 = pneg %p320
      $region74: #{residual_block2d_forward.1} parent=71 // pred_check_branch
        %2143 = sbr.rel (%p2141) target = $region76
      $region75: #{residual_block2d_forward.1} parent=71 // pred_region
        _
      $region76: #{residual_block2d_forward.1} parent=71 // pred_fallthru
        _
    $region72: #{residual_block2d_forward.1} parent=5 // pred_fallthru
      _
    %p2144 = scmp.le.s32.totalorder 2, %s19
    // Predicated region
    $region77: #{residual_block2d_forward.1} parent=5 // pred_check
      %p2145 = pneg %p2144
    $region78: #{residual_block2d_forward.1} parent=5 // pred_check_branch
      %2147 = sbr.rel (%p2145) target = $region80
    $region79: #{residual_block2d_forward.1} parent=5 // pred_region
      %s2148 = ssub.s32 %s19, 2
      // Predicated region
      $region81: #{residual_block2d_forward.1} parent=79 // pred_check
        %p2149 = pneg %p326
      $region82: #{residual_block2d_forward.1} parent=79 // pred_check_branch
        %2151 = sbr.rel (%p2149) target = $region84
      $region83: #{residual_block2d_forward.1} parent=79 // pred_region
        %p2152 = scmp.lt.s32.totalorder %s25, 1
        %s2153 = scalar_select %p2152, %s25, 1
        %s2154 = smul.addr %s2153, 6
        %s2155 = smul.addr %s2154, 8
        %s2156 = scalar_lea.vmem %s13, %s2155
      $region84: #{residual_block2d_forward.1} parent=79 // pred_fallthru
        _
    $region80: #{residual_block2d_forward.1} parent=5 // pred_fallthru
      _
  $region6: #{residual_block2d_forward.1} parent=0 // loop_footer
    %s23 = sadd.s32 1, %s19
  $region7: #{residual_block2d_forward.1} parent=0 // loop_footer_branch
    %18 = sbr.rel target = $region3
  $region8: #{residual_block2d_forward.1} parent=0 // loop_exit
    _

</llo_original>
